<compile_context>
chip_gen: v7x
topology: tpu7x:2x2x1
jax: 0.10.0
libtpu: 0.0.40
codegen_flags: <defaults>
</compile_context>

<pallas_src>
import math

import jax
import jax.numpy as jnp
from jax.experimental import pallas as pl
from jax.experimental.pallas import tpu as pltpu


def _round_up(n, m):
    return ((n + m - 1) // m) * m


def _silu(v):
    return v * jax.nn.sigmoid(v)


def _layernorm(v, eps=1e-5):
    # Affine (gamma/beta) is folded into the following Linear at init time.
    mu = jnp.mean(v, axis=-1, keepdims=True)
    var = jnp.maximum(jnp.mean(v * v, axis=-1, keepdims=True) - mu * mu, 0.0)
    return (v - mu) * jax.lax.rsqrt(var + eps)


def full_score_kernel(
    # batch-blocked input slab: [ang(pos_dim) | x(D) | x0(D) | zero-pad]
    slab_ref,
    # VMEM-resident weights (bf16) / biases (f32)
    te_w0_ref, te_b0_ref, te_w1_ref, te_b1_ref,
    xe_w0_ref, xe_b0_ref, xe_w1_ref, xe_b1_ref,
    w_ih_x_ref, w_ih_t_ref, b_lstm_ref,
    n_w0_ref, n_b0_ref, n_w1_ref, n_b1_ref, n_w2_ref, n_b2_ref,
    # batch-blocked, lane-dense output
    out_ref,
):
    f32 = jnp.float32
    bf16 = jnp.bfloat16
    pos_dim = te_w0_ref.shape[0]

    slab = slab_ref[...]                                   # (TN, xpad) f32

    # ---- sinusoidal time embedding (phase trick): lanes [0, pos_dim) of the
    # slab hold 100*t*freq for the sin half and 100*t*freq + pi/2 for the cos
    # half, so a single sin produces the full embedding.
    emb = jnp.sin(slab[:, :pos_dim])                        # (TN, pos_dim) f32

    # ---- t_encoder MLP: SiLU(Linear) -> LayerNorm -> Linear -> SiLU ----
    h = (jnp.dot(emb.astype(bf16), te_w0_ref[...], preferred_element_type=f32)
         + te_b0_ref[...])
    h = _layernorm(_silu(h))
    temb = _silu(jnp.dot(h.astype(bf16), te_w1_ref[...],
                         preferred_element_type=f32) + te_b1_ref[...])   # (TN, 2*pos_dim)

    # ---- x_encoder MLP on the full slab: xe_w0 has zero rows for the angle
    # and padding lanes, so only the [x | x0] lanes contribute (exact).
    h = (jnp.dot(slab.astype(bf16), xe_w0_ref[...], preferred_element_type=f32)
         + xe_b0_ref[...])
    h = _layernorm(_silu(h))
    xemb = _silu(jnp.dot(h.astype(bf16), xe_w1_ref[...],
                         preferred_element_type=f32) + xe_b1_ref[...])   # (TN, 2*pos_dim)

    # ---- single-step LSTM cell, zero initial state: forget gate * c0 == 0 and
    # W_hh @ h0 == 0 exactly, so only i/g/o gate columns are kept.  Split-K
    # (xemb @ W_x + temb @ W_t) avoids materializing cat([xemb, temb]).
    gates = (jnp.dot(xemb.astype(bf16), w_ih_x_ref[...], preferred_element_type=f32)
             + jnp.dot(temb.astype(bf16), w_ih_t_ref[...], preferred_element_type=f32)
             + b_lstm_ref[...])                              # (TN, 3*H)
    H = gates.shape[-1] // 3
    i_g = jax.nn.sigmoid(gates[:, 0:H])
    g_g = jnp.tanh(gates[:, H:2 * H])
    o_g = jax.nn.sigmoid(gates[:, 2 * H:3 * H])
    h = o_g * jnp.tanh(i_g * g_g)                            # (TN, 2*t_enc_dim)

    # ---- decoder MLP: 2 x (SiLU(Linear) -> LayerNorm) + final Linear (lane-dense)
    h = (jnp.dot(h.astype(bf16), n_w0_ref[...], preferred_element_type=f32)
         + n_b0_ref[...])
    h = _layernorm(_silu(h))
    h = (jnp.dot(h.astype(bf16), n_w1_ref[...], preferred_element_type=f32)
         + n_b1_ref[...])
    h = _layernorm(_silu(h))
    out_ref[...] = (jnp.dot(h.astype(bf16), n_w2_ref[...], preferred_element_type=f32)
                    + n_b2_ref[...])


def _linear_init(key, fan_in, fan_out):
    """PyTorch nn.Linear default init; weight returned as (in, out)."""
    kw, kb = jax.random.split(key)
    bound = 1.0 / math.sqrt(fan_in)
    w = jax.random.uniform(kw, (fan_in, fan_out), jnp.float32, -bound, bound)
    b = jax.random.uniform(kb, (1, fan_out), jnp.float32, -bound, bound)
    return w, b


def init_params(key, dimension, encoder_layers=(64,), pos_dim=64,
                decoder_layers=(256, 256)):
    assert len(encoder_layers) == 1 and len(decoder_layers) == 2, \
        "kernel body is written for the default FullScoreNetwork topology"
    t_enc_dim = 2 * pos_dim
    enc_w = encoder_layers[0]
    dec0, dec1 = decoder_layers
    hidden = 2 * t_enc_dim            # LSTM hidden size
    lstm_in = 4 * pos_dim             # == 2 * t_enc_dim
    half = pos_dim // 2
    # lane-dense slab: [ang(pos_dim) | x(D) | x0(D) | 0-pad]
    xpad = _round_up(max(pos_dim + 2 * dimension, 128), 128)
    out_pad = _round_up(max(dimension, 128), 128)

    keys = jax.random.split(key, 8)
    ki = iter(keys)

    # t_encoder: MLP(pos_dim, [enc_w, t_enc_dim])
    te_w0, te_b0 = _linear_init(next(ki), pos_dim, enc_w)
    te_w1, te_b1 = _linear_init(next(ki), enc_w, t_enc_dim)
    # x_encoder: MLP(2*dimension, [enc_w, t_enc_dim])
    xe_w0, xe_b0 = _linear_init(next(ki), 2 * dimension, enc_w)
    xe_w1, xe_b1 = _linear_init(next(ki), enc_w, t_enc_dim)
    # LSTM(input_size=4*pos_dim, hidden_size=2*t_enc_dim), PyTorch init U(+-1/sqrt(H))
    kb_ = 1.0 / math.sqrt(hidden)
    k1, k2, k3 = jax.random.split(next(ki), 3)
    w_ih = jax.random.uniform(k1, (lstm_in, 4 * hidden), jnp.float32, -kb_, kb_)
    b_ih = jax.random.uniform(k2, (1, 4 * hidden), jnp.float32, -kb_, kb_)
    b_hh = jax.random.uniform(k3, (1, 4 * hidden), jnp.float32, -kb_, kb_)
    b_full = b_ih + b_hh

    # keep only i / g / o gate columns (PyTorch order i,f,g,o); f*c0 == 0 exactly
    def _igo(a):
        return jnp.concatenate(
            [a[:, 0:hidden], a[:, 2 * hidden:3 * hidden], a[:, 3 * hidden:4 * hidden]],
            axis=-1)
    w_ih_igo = _igo(w_ih)                 # (lstm_in, 3*hidden)
    b_igo = _igo(b_full)                  # (1, 3*hidden)

    # decoder: MLP(2*t_enc_dim, [dec0, dec1, dimension])
    n_w0, n_b0 = _linear_init(next(ki), hidden, dec0)
    n_w1, n_b1 = _linear_init(next(ki), dec0, dec1)
    n_w2, n_b2 = _linear_init(next(ki), dec1, dimension)

    # Fold LayerNorm affine (PyTorch default gamma=1, beta=0) into the next
    # Linear: LN(v)*g + be then (W, b)  ==  LN(v) @ (diag(g) W) + (b + be @ W).
    def fold_ln(gamma, beta, w, b):
        return gamma[:, None] * w, b + beta[None, :] @ w

    te_w1f, te_b1f = fold_ln(jnp.ones((enc_w,)), jnp.zeros((enc_w,)), te_w1, te_b1)
    xe_w1f, xe_b1f = fold_ln(jnp.ones((enc_w,)), jnp.zeros((enc_w,)), xe_w1, xe_b1)
    n_w1f, n_b1f = fold_ln(jnp.ones((dec0,)), jnp.zeros((dec0,)), n_w1, n_b1)
    n_w2f, n_b2f = fold_ln(jnp.ones((dec1,)), jnp.zeros((dec1,)), n_w2, n_b2)

    # lane-dense zero padding (exact: angle/pad lanes hit zero weight rows;
    # padded output columns are sliced off and never feed a LayerNorm)
    xe_w0_p = (jnp.zeros((xpad, enc_w), jnp.float32)
               .at[pos_dim:pos_dim + 2 * dimension].set(xe_w0))
    n_w2_p = jnp.zeros((dec1, out_pad), jnp.float32).at[:, :dimension].set(n_w2f)
    n_b2_p = jnp.zeros((1, out_pad), jnp.float32).at[:, :dimension].set(n_b2f)

    # sinusoidal-embedding constants used by the wrapper (phase trick):
    # ang = t * (100 * [freq | freq]) + [0 | pi/2]  ->  emb = sin(ang)
    freq = jnp.exp(jnp.arange(half, dtype=jnp.float32)
                   * -(math.log(10000.0) / (half - 1)))
    freq2s = (100.0 * jnp.tile(freq, 2)).reshape(1, pos_dim)
    phase = jnp.concatenate([jnp.zeros((half,), jnp.float32),
                             jnp.full((half,), math.pi / 2, jnp.float32)]).reshape(1, pos_dim)

    bf = lambda a: a.astype(jnp.bfloat16)   # MXU operands only; biases stay f32
    flat = [
        # t_encoder
        bf(te_w0), te_b0, bf(te_w1f), te_b1f,
        # x_encoder (first-layer rows zero-padded to the slab width)
        bf(xe_w0_p), xe_b0, bf(xe_w1f), xe_b1f,
        # LSTM (i/g/o only, split-K: rows multiplying xemb / temb)
        bf(w_ih_igo[:t_enc_dim]), bf(w_ih_igo[t_enc_dim:]), b_igo,
        # decoder
        bf(n_w0), n_b0, bf(n_w1f), n_b1f, bf(n_w2_p), n_b2_p,
    ]
    raw = dict(freq=freq.reshape(1, half),
               te_w0=te_w0, te_b0=te_b0, te_w1=te_w1, te_b1=te_b1,
               xe_w0=xe_w0, xe_b0=xe_b0, xe_w1=xe_w1, xe_b1=xe_b1,
               w_ih=w_ih, b_ih=b_ih, b_hh=b_hh,
               n_w0=n_w0, n_b0=n_b0, n_w1=n_w1, n_b1=n_b1, n_w2=n_w2, n_b2=n_b2)
    return {"flat": flat, "raw": raw, "freq2s": freq2s, "phase": phase,
            "dimension": dimension, "pos_dim": pos_dim,
            "xpad": xpad, "out_pad": out_pad}


def _pick_tile_n(n):
    if n <= 16:
        return _round_up(max(n, 8), 8)
    # >= 2 grid steps so both v7x TensorCores get work (no-op on v5e/v6e);
    # cap the tile so the activation working set stays well inside VMEM.
    return min(1024, _round_up((n + 1) // 2, 8))


def full_score_network(params, t, x, x0):
    """Pallas forward pass: t (N,1), x (N,D), x0 (N,D) -> score (N,D)."""
    if t.ndim == 1:
        t = t[:, None]
    if x.ndim == 1:
        x = x[None, :]
    if x0.ndim == 1:
        x0 = x0[None, :]
    N, D = x.shape
    pos_dim, xpad, out_pad = params["pos_dim"], params["xpad"], params["out_pad"]

    tile_n = _pick_tile_n(N)
    n_pad = _round_up(N, tile_n)

    # Lane-dense input slab: [angles | x | x0 | 0-pad], batch zero-padded.
    # Padded batch rows produce finite garbage that is sliced off below.
    ang = t.astype(jnp.float32) * params["freq2s"] + params["phase"]      # (N, pos_dim)
    slab = jnp.concatenate(
        [ang, x.astype(jnp.float32), x0.astype(jnp.float32)], axis=-1)
    slab = jnp.pad(slab, ((0, n_pad - N), (0, xpad - (pos_dim + 2 * D))))

    weights = params["flat"]
    in_specs = (
        [pl.BlockSpec((tile_n, xpad), lambda i: (i, 0))]                  # input slab
        + [pl.BlockSpec(w.shape, lambda i: (0, 0)) for w in weights]      # resident
    )

    out = pl.pallas_call(
        full_score_kernel,
        out_shape=jax.ShapeDtypeStruct((n_pad, out_pad), jnp.float32),
        grid=(pl.cdiv(n_pad, tile_n),),
        in_specs=in_specs,
        out_specs=pl.BlockSpec((tile_n, out_pad), lambda i: (i, 0)),
        compiler_params=pltpu.CompilerParams(
            dimension_semantics=("parallel",),        # megacore on v7x
            vmem_limit_bytes=48 * 1024 * 1024),       # explicit budget, < v7x 64 MiB
    )(slab, *weights)
    return out[:N, :D]


def _reference_forward(raw, t, x, x0, matmul_dtype=jnp.float32):
    """Pure-JAX mirror of the PyTorch FullScoreNetwork forward (for validation).

    matmul_dtype=jnp.bfloat16 mirrors the kernel's MXU operand precision
    (f32 accumulation) so structural correctness can be checked tightly.
    """
    def dot(a, b):
        return jnp.dot(a.astype(matmul_dtype), b.astype(matmul_dtype),
                       preferred_element_type=jnp.float32)

    silu = lambda v: v * jax.nn.sigmoid(v)

    def ln(v, eps=1e-5):
        mu = jnp.mean(v, -1, keepdims=True)
        var = jnp.mean((v - mu) ** 2, -1, keepdims=True)
        return (v - mu) * jax.lax.rsqrt(var + eps)

    ang = 100.0 * t * raw["freq"]
    emb = jnp.concatenate([jnp.sin(ang), jnp.cos(ang)], -1)
    h = ln(silu(dot(emb, raw["te_w0"]) + raw["te_b0"]))
    temb = silu(dot(h, raw["te_w1"]) + raw["te_b1"])
    s = jnp.concatenate([x, x0], -1)
    h = ln(silu(dot(s, raw["xe_w0"]) + raw["xe_b0"]))
    xemb = silu(dot(h, raw["xe_w1"]) + raw["xe_b1"])
    hin = jnp.concatenate([xemb, temb], -1)
    gates = dot(hin, raw["w_ih"]) + raw["b_ih"] + raw["b_hh"]
    H = raw["w_ih"].shape[-1] // 4
    i_g = jax.nn.sigmoid(gates[:, 0:H])
    g_g = jnp.tanh(gates[:, 2 * H:3 * H])
    o_g = jax.nn.sigmoid(gates[:, 3 * H:4 * H])
    h = o_g * jnp.tanh(i_g * g_g)          # f_gate * c0 == 0 (single step, c0 = 0)
    h = ln(silu(dot(h, raw["n_w0"]) + raw["n_b0"]))
    h = ln(silu(dot(h, raw["n_w1"]) + raw["n_b1"]))
    return dot(h, raw["n_w2"]) + raw["n_b2"]


if __name__ == "__main__":
    key = jax.random.PRNGKey(0)
    dimension = 8
    N = 8

    kp, kt, kx, kx0 = jax.random.split(key, 4)
    params = init_params(kp, dimension)
    t = jax.random.uniform(kt, (N, 1), jnp.float32)
    x = jax.random.normal(kx, (N, dimension), jnp.float32)
    x0 = jax.random.normal(kx0, (N, dimension), jnp.float32)

    out = full_score_network(params, t, x, x0)
    out = jax.block_until_ready(out)

    assert out.shape == (N, dimension) and out.dtype == jnp.float32
    assert bool(jnp.all(jnp.isfinite(out)))

    # Structural check: same MXU operand precision as the kernel (bf16, f32 acc).
    ref_bf16 = _reference_forward(params["raw"], t, x, x0, matmul_dtype=jnp.bfloat16)
    err_bf16 = float(jnp.max(jnp.abs(out - ref_bf16)))
    assert err_bf16 < 1e-2, f"mismatch vs bf16-matmul reference: {err_bf16}"

    # Numerics sanity check vs the pure-f32 reference (bf16 MXU operands only).
    ref_f32 = _reference_forward(params["raw"], t, x, x0, matmul_dtype=jnp.float32)
    err_f32 = float(jnp.max(jnp.abs(out - ref_f32)))
    assert err_f32 < 5e-2, f"mismatch vs f32 reference: {err_f32}"

    print("KERNEL_OK")
</pallas_src>

<mosaic_0001>
module attributes {stable_mosaic.version = 11 : i64} {
  func.func @full_score_kernel(%arg0: i32, %arg1: memref<8x128xf32, #tpu.memory_space<vmem>>, %arg2: memref<64x64xbf16, #tpu.memory_space<vmem>>, %arg3: memref<1x64xf32, #tpu.memory_space<vmem>>, %arg4: memref<64x128xbf16, #tpu.memory_space<vmem>>, %arg5: memref<1x128xf32, #tpu.memory_space<vmem>>, %arg6: memref<128x64xbf16, #tpu.memory_space<vmem>>, %arg7: memref<1x64xf32, #tpu.memory_space<vmem>>, %arg8: memref<64x128xbf16, #tpu.memory_space<vmem>>, %arg9: memref<1x128xf32, #tpu.memory_space<vmem>>, %arg10: memref<128x768xbf16, #tpu.memory_space<vmem>>, %arg11: memref<128x768xbf16, #tpu.memory_space<vmem>>, %arg12: memref<1x768xf32, #tpu.memory_space<vmem>>, %arg13: memref<256x256xbf16, #tpu.memory_space<vmem>>, %arg14: memref<1x256xf32, #tpu.memory_space<vmem>>, %arg15: memref<256x256xbf16, #tpu.memory_space<vmem>>, %arg16: memref<1x256xf32, #tpu.memory_space<vmem>>, %arg17: memref<256x128xbf16, #tpu.memory_space<vmem>>, %arg18: memref<1x128xf32, #tpu.memory_space<vmem>>, %arg19: memref<8x128xf32, #tpu.memory_space<vmem>>) attributes {dimension_semantics = [#tpu.dimension_semantics<parallel>], iteration_bounds = array<i64: 1>, scalar_prefetch = 0 : i64, scratch_operands = 0 : i64, tpu.core_type = #tpu.core_type<tc>, window_params = [{transform_indices = @transform_0, window_bounds = array<i64: 8, 128>}, {pipeline_mode = #tpu.pipeline_mode<synchronous>, transform_indices = @transform_1, window_bounds = array<i64: 64, 64>}, {pipeline_mode = #tpu.pipeline_mode<synchronous>, transform_indices = @transform_2, window_bounds = array<i64: 1, 64>}, {pipeline_mode = #tpu.pipeline_mode<synchronous>, transform_indices = @transform_3, window_bounds = array<i64: 64, 128>}, {pipeline_mode = #tpu.pipeline_mode<synchronous>, transform_indices = @transform_4, window_bounds = array<i64: 1, 128>}, {pipeline_mode = #tpu.pipeline_mode<synchronous>, transform_indices = @transform_5, window_bounds = array<i64: 128, 64>}, {pipeline_mode = #tpu.pipeline_mode<synchronous>, transform_indices = @transform_6, window_bounds = array<i64: 1, 64>}, {pipeline_mode = #tpu.pipeline_mode<synchronous>, transform_indices = @transform_7, window_bounds = array<i64: 64, 128>}, {pipeline_mode = #tpu.pipeline_mode<synchronous>, transform_indices = @transform_8, window_bounds = array<i64: 1, 128>}, {pipeline_mode = #tpu.pipeline_mode<synchronous>, transform_indices = @transform_9, window_bounds = array<i64: 128, 768>}, {pipeline_mode = #tpu.pipeline_mode<synchronous>, transform_indices = @transform_10, window_bounds = array<i64: 128, 768>}, {pipeline_mode = #tpu.pipeline_mode<synchronous>, transform_indices = @transform_11, window_bounds = array<i64: 1, 768>}, {pipeline_mode = #tpu.pipeline_mode<synchronous>, transform_indices = @transform_12, window_bounds = array<i64: 256, 256>}, {pipeline_mode = #tpu.pipeline_mode<synchronous>, transform_indices = @transform_13, window_bounds = array<i64: 1, 256>}, {pipeline_mode = #tpu.pipeline_mode<synchronous>, transform_indices = @transform_14, window_bounds = array<i64: 256, 256>}, {pipeline_mode = #tpu.pipeline_mode<synchronous>, transform_indices = @transform_15, window_bounds = array<i64: 1, 256>}, {pipeline_mode = #tpu.pipeline_mode<synchronous>, transform_indices = @transform_16, window_bounds = array<i64: 256, 128>}, {pipeline_mode = #tpu.pipeline_mode<synchronous>, transform_indices = @transform_17, window_bounds = array<i64: 1, 128>}, {transform_indices = @transform_18, window_bounds = array<i64: 8, 128>}]} {
    %c0 = arith.constant 0 : index
    %c0_0 = arith.constant 0 : index
    %0 = vector.load %arg1[%c0, %c0_0] : memref<8x128xf32, #tpu.memory_space<vmem>>, vector<8x128xf32>
    %1 = vector.extract_strided_slice %0 {offsets = [0, 0], sizes = [8, 64], strides = [1, 1]} : vector<8x128xf32> to vector<8x64xf32>
    %2 = math.sin %1 : vector<8x64xf32>
    %3 = arith.truncf %2 : vector<8x64xf32> to vector<8x64xbf16>
    %c0_1 = arith.constant 0 : index
    %c0_2 = arith.constant 0 : index
    %4 = vector.load %arg2[%c0_1, %c0_2] : memref<64x64xbf16, #tpu.memory_space<vmem>>, vector<64x64xbf16>
    %cst = arith.constant dense<0.000000e+00> : vector<8x64xf32>
    %5 = tpu.matmul %3, %4, %cst {dimension_numbers = #tpu.dot_dimension_numbers<[1], [0], [0], [1], [0, 0, 1, 1], [], []>} : vector<8x64xbf16>, vector<64x64xbf16>, vector<8x64xf32> -> vector<8x64xf32>
    %c0_3 = arith.constant 0 : index
    %c0_4 = arith.constant 0 : index
    %6 = vector.load %arg3[%c0_3, %c0_4] : memref<1x64xf32, #tpu.memory_space<vmem>>, vector<1x64xf32>
    %7 = vector.broadcast %6 : vector<1x64xf32> to vector<8x64xf32>
    %8 = arith.addf %5, %7 : vector<8x64xf32>
    %9 = arith.negf %8 : vector<8x64xf32>
    %10 = math.exp %9 : vector<8x64xf32>
    %cst_5 = arith.constant 1.000000e+00 : f32
    %11 = vector.broadcast %cst_5 : f32 to vector<8x64xf32>
    %12 = arith.addf %11, %10 : vector<8x64xf32>
    %13 = arith.divf %11, %12 : vector<8x64xf32>
    %14 = arith.mulf %8, %13 : vector<8x64xf32>
    %cst_6 = arith.constant dense<0.000000e+00> : vector<8xf32>
    %15 = vector.multi_reduction <add>, %14, %cst_6 [1] : vector<8x64xf32> to vector<8xf32>
    %16 = vector.shape_cast %15 : vector<8xf32> to vector<8x1xf32>
    %cst_7 = arith.constant 6.400000e+01 : f32
    %17 = vector.broadcast %cst_7 : f32 to vector<8x1xf32>
    %18 = arith.divf %16, %17 : vector<8x1xf32>
    %19 = arith.mulf %14, %14 : vector<8x64xf32>
    %cst_8 = arith.constant dense<0.000000e+00> : vector<8xf32>
    %20 = vector.multi_reduction <add>, %19, %cst_8 [1] : vector<8x64xf32> to vector<8xf32>
    %21 = vector.shape_cast %20 : vector<8xf32> to vector<8x1xf32>
    %cst_9 = arith.constant 6.400000e+01 : f32
    %22 = vector.broadcast %cst_9 : f32 to vector<8x1xf32>
    %23 = arith.divf %21, %22 : vector<8x1xf32>
    %24 = arith.mulf %18, %18 : vector<8x1xf32>
    %25 = arith.subf %23, %24 : vector<8x1xf32>
    %cst_10 = arith.constant 0.000000e+00 : f32
    %26 = vector.broadcast %cst_10 : f32 to vector<8x1xf32>
    %27 = arith.maximumf %25, %26 : vector<8x1xf32>
    %28 = vector.broadcast %18 : vector<8x1xf32> to vector<8x64xf32>
    %29 = arith.subf %14, %28 : vector<8x64xf32>
    %cst_11 = arith.constant 9.99999974E-6 : f32
    %30 = vector.broadcast %cst_11 : f32 to vector<8x1xf32>
    %31 = arith.addf %27, %30 : vector<8x1xf32>
    %32 = math.rsqrt %31 : vector<8x1xf32>
    %33 = vector.broadcast %32 : vector<8x1xf32> to vector<8x64xf32>
    %34 = arith.mulf %29, %33 : vector<8x64xf32>
    %35 = arith.truncf %34 : vector<8x64xf32> to vector<8x64xbf16>
    %c0_12 = arith.constant 0 : index
    %c0_13 = arith.constant 0 : index
    %36 = vector.load %arg4[%c0_12, %c0_13] : memref<64x128xbf16, #tpu.memory_space<vmem>>, vector<64x128xbf16>
    %cst_14 = arith.constant dense<0.000000e+00> : vector<8x128xf32>
    %37 = tpu.matmul %35, %36, %cst_14 {dimension_numbers = #tpu.dot_dimension_numbers<[1], [0], [0], [1], [0, 0, 1, 1], [], []>} : vector<8x64xbf16>, vector<64x128xbf16>, vector<8x128xf32> -> vector<8x128xf32>
    %c0_15 = arith.constant 0 : index
    %c0_16 = arith.constant 0 : index
    %38 = vector.load %arg5[%c0_15, %c0_16] : memref<1x128xf32, #tpu.memory_space<vmem>>, vector<1x128xf32>
    %39 = vector.broadcast %38 : vector<1x128xf32> to vector<8x128xf32>
    %40 = arith.addf %37, %39 : vector<8x128xf32>
    %41 = arith.negf %40 : vector<8x128xf32>
    %42 = math.exp %41 : vector<8x128xf32>
    %cst_17 = arith.constant 1.000000e+00 : f32
    %43 = vector.broadcast %cst_17 : f32 to vector<8x128xf32>
    %44 = arith.addf %43, %42 : vector<8x128xf32>
    %45 = arith.divf %43, %44 : vector<8x128xf32>
    %46 = arith.mulf %40, %45 : vector<8x128xf32>
    %47 = arith.truncf %0 : vector<8x128xf32> to vector<8x128xbf16>
    %c0_18 = arith.constant 0 : index
    %c0_19 = arith.constant 0 : index
    %48 = vector.load %arg6[%c0_18, %c0_19] : memref<128x64xbf16, #tpu.memory_space<vmem>>, vector<128x64xbf16>
    %cst_20 = arith.constant dense<0.000000e+00> : vector<8x64xf32>
    %49 = tpu.matmul %47, %48, %cst_20 {dimension_numbers = #tpu.dot_dimension_numbers<[1], [0], [0], [1], [0, 0, 1, 1], [], []>} : vector<8x128xbf16>, vector<128x64xbf16>, vector<8x64xf32> -> vector<8x64xf32>
    %c0_21 = arith.constant 0 : index
    %c0_22 = arith.constant 0 : index
    %50 = vector.load %arg7[%c0_21, %c0_22] : memref<1x64xf32, #tpu.memory_space<vmem>>, vector<1x64xf32>
    %51 = vector.broadcast %50 : vector<1x64xf32> to vector<8x64xf32>
    %52 = arith.addf %49, %51 : vector<8x64xf32>
    %53 = arith.negf %52 : vector<8x64xf32>
    %54 = math.exp %53 : vector<8x64xf32>
    %cst_23 = arith.constant 1.000000e+00 : f32
    %55 = vector.broadcast %cst_23 : f32 to vector<8x64xf32>
    %56 = arith.addf %55, %54 : vector<8x64xf32>
    %57 = arith.divf %55, %56 : vector<8x64xf32>
    %58 = arith.mulf %52, %57 : vector<8x64xf32>
    %cst_24 = arith.constant dense<0.000000e+00> : vector<8xf32>
    %59 = vector.multi_reduction <add>, %58, %cst_24 [1] : vector<8x64xf32> to vector<8xf32>
    %60 = vector.shape_cast %59 : vector<8xf32> to vector<8x1xf32>
    %cst_25 = arith.constant 6.400000e+01 : f32
    %61 = vector.broadcast %cst_25 : f32 to vector<8x1xf32>
    %62 = arith.divf %60, %61 : vector<8x1xf32>
    %63 = arith.mulf %58, %58 : vector<8x64xf32>
    %cst_26 = arith.constant dense<0.000000e+00> : vector<8xf32>
    %64 = vector.multi_reduction <add>, %63, %cst_26 [1] : vector<8x64xf32> to vector<8xf32>
    %65 = vector.shape_cast %64 : vector<8xf32> to vector<8x1xf32>
    %cst_27 = arith.constant 6.400000e+01 : f32
    %66 = vector.broadcast %cst_27 : f32 to vector<8x1xf32>
    %67 = arith.divf %65, %66 : vector<8x1xf32>
    %68 = arith.mulf %62, %62 : vector<8x1xf32>
    %69 = arith.subf %67, %68 : vector<8x1xf32>
    %cst_28 = arith.constant 0.000000e+00 : f32
    %70 = vector.broadcast %cst_28 : f32 to vector<8x1xf32>
    %71 = arith.maximumf %69, %70 : vector<8x1xf32>
    %72 = vector.broadcast %62 : vector<8x1xf32> to vector<8x64xf32>
    %73 = arith.subf %58, %72 : vector<8x64xf32>
    %cst_29 = arith.constant 9.99999974E-6 : f32
    %74 = vector.broadcast %cst_29 : f32 to vector<8x1xf32>
    %75 = arith.addf %71, %74 : vector<8x1xf32>
    %76 = math.rsqrt %75 : vector<8x1xf32>
    %77 = vector.broadcast %76 : vector<8x1xf32> to vector<8x64xf32>
    %78 = arith.mulf %73, %77 : vector<8x64xf32>
    %79 = arith.truncf %78 : vector<8x64xf32> to vector<8x64xbf16>
    %c0_30 = arith.constant 0 : index
    %c0_31 = arith.constant 0 : index
    %80 = vector.load %arg8[%c0_30, %c0_31] : memref<64x128xbf16, #tpu.memory_space<vmem>>, vector<64x128xbf16>
    %cst_32 = arith.constant dense<0.000000e+00> : vector<8x128xf32>
    %81 = tpu.matmul %79, %80, %cst_32 {dimension_numbers = #tpu.dot_dimension_numbers<[1], [0], [0], [1], [0, 0, 1, 1], [], []>} : vector<8x64xbf16>, vector<64x128xbf16>, vector<8x128xf32> -> vector<8x128xf32>
    %c0_33 = arith.constant 0 : index
    %c0_34 = arith.constant 0 : index
    %82 = vector.load %arg9[%c0_33, %c0_34] : memref<1x128xf32, #tpu.memory_space<vmem>>, vector<1x128xf32>
    %83 = vector.broadcast %82 : vector<1x128xf32> to vector<8x128xf32>
    %84 = arith.addf %81, %83 : vector<8x128xf32>
    %85 = arith.negf %84 : vector<8x128xf32>
    %86 = math.exp %85 : vector<8x128xf32>
    %cst_35 = arith.constant 1.000000e+00 : f32
    %87 = vector.broadcast %cst_35 : f32 to vector<8x128xf32>
    %88 = arith.addf %87, %86 : vector<8x128xf32>
    %89 = arith.divf %87, %88 : vector<8x128xf32>
    %90 = arith.mulf %84, %89 : vector<8x128xf32>
    %91 = arith.truncf %90 : vector<8x128xf32> to vector<8x128xbf16>
    %c0_36 = arith.constant 0 : index
    %c0_37 = arith.constant 0 : index
    %92 = vector.load %arg10[%c0_36, %c0_37] : memref<128x768xbf16, #tpu.memory_space<vmem>>, vector<128x768xbf16>
    %cst_38 = arith.constant dense<0.000000e+00> : vector<8x768xf32>
    %93 = tpu.matmul %91, %92, %cst_38 {dimension_numbers = #tpu.dot_dimension_numbers<[1], [0], [0], [1], [0, 0, 1, 1], [], []>} : vector<8x128xbf16>, vector<128x768xbf16>, vector<8x768xf32> -> vector<8x768xf32>
    %94 = arith.truncf %46 : vector<8x128xf32> to vector<8x128xbf16>
    %c0_39 = arith.constant 0 : index
    %c0_40 = arith.constant 0 : index
    %95 = vector.load %arg11[%c0_39, %c0_40] : memref<128x768xbf16, #tpu.memory_space<vmem>>, vector<128x768xbf16>
    %cst_41 = arith.constant dense<0.000000e+00> : vector<8x768xf32>
    %96 = tpu.matmul %94, %95, %cst_41 {dimension_numbers = #tpu.dot_dimension_numbers<[1], [0], [0], [1], [0, 0, 1, 1], [], []>} : vector<8x128xbf16>, vector<128x768xbf16>, vector<8x768xf32> -> vector<8x768xf32>
    %97 = arith.addf %93, %96 : vector<8x768xf32>
    %c0_42 = arith.constant 0 : index
    %c0_43 = arith.constant 0 : index
    %98 = vector.load %arg12[%c0_42, %c0_43] : memref<1x768xf32, #tpu.memory_space<vmem>>, vector<1x768xf32>
    %99 = vector.broadcast %98 : vector<1x768xf32> to vector<8x768xf32>
    %100 = arith.addf %97, %99 : vector<8x768xf32>
    %101 = vector.extract_strided_slice %100 {offsets = [0, 0], sizes = [8, 256], strides = [1, 1]} : vector<8x768xf32> to vector<8x256xf32>
    %102 = arith.negf %101 : vector<8x256xf32>
    %103 = math.exp %102 : vector<8x256xf32>
    %cst_44 = arith.constant 1.000000e+00 : f32
    %104 = vector.broadcast %cst_44 : f32 to vector<8x256xf32>
    %105 = arith.addf %104, %103 : vector<8x256xf32>
    %106 = arith.divf %104, %105 : vector<8x256xf32>
    %107 = vector.extract_strided_slice %100 {offsets = [0, 256], sizes = [8, 256], strides = [1, 1]} : vector<8x768xf32> to vector<8x256xf32>
    %108 = math.tanh %107 : vector<8x256xf32>
    %109 = vector.extract_strided_slice %100 {offsets = [0, 512], sizes = [8, 256], strides = [1, 1]} : vector<8x768xf32> to vector<8x256xf32>
    %110 = arith.negf %109 : vector<8x256xf32>
    %111 = math.exp %110 : vector<8x256xf32>
    %cst_45 = arith.constant 1.000000e+00 : f32
    %112 = vector.broadcast %cst_45 : f32 to vector<8x256xf32>
    %113 = arith.addf %112, %111 : vector<8x256xf32>
    %114 = arith.divf %112, %113 : vector<8x256xf32>
    %115 = arith.mulf %106, %108 : vector<8x256xf32>
    %116 = math.tanh %115 : vector<8x256xf32>
    %117 = arith.mulf %114, %116 : vector<8x256xf32>
    %118 = arith.truncf %117 : vector<8x256xf32> to vector<8x256xbf16>
    %c0_46 = arith.constant 0 : index
    %c0_47 = arith.constant 0 : index
    %119 = vector.load %arg13[%c0_46, %c0_47] : memref<256x256xbf16, #tpu.memory_space<vmem>>, vector<256x256xbf16>
    %cst_48 = arith.constant dense<0.000000e+00> : vector<8x256xf32>
    %120 = tpu.matmul %118, %119, %cst_48 {dimension_numbers = #tpu.dot_dimension_numbers<[1], [0], [0], [1], [0, 0, 1, 1], [], []>} : vector<8x256xbf16>, vector<256x256xbf16>, vector<8x256xf32> -> vector<8x256xf32>
    %c0_49 = arith.constant 0 : index
    %c0_50 = arith.constant 0 : index
    %121 = vector.load %arg14[%c0_49, %c0_50] : memref<1x256xf32, #tpu.memory_space<vmem>>, vector<1x256xf32>
    %122 = vector.broadcast %121 : vector<1x256xf32> to vector<8x256xf32>
    %123 = arith.addf %120, %122 : vector<8x256xf32>
    %124 = arith.negf %123 : vector<8x256xf32>
    %125 = math.exp %124 : vector<8x256xf32>
    %cst_51 = arith.constant 1.000000e+00 : f32
    %126 = vector.broadcast %cst_51 : f32 to vector<8x256xf32>
    %127 = arith.addf %126, %125 : vector<8x256xf32>
    %128 = arith.divf %126, %127 : vector<8x256xf32>
    %129 = arith.mulf %123, %128 : vector<8x256xf32>
    %cst_52 = arith.constant dense<0.000000e+00> : vector<8xf32>
    %130 = vector.multi_reduction <add>, %129, %cst_52 [1] : vector<8x256xf32> to vector<8xf32>
    %131 = vector.shape_cast %130 : vector<8xf32> to vector<8x1xf32>
    %cst_53 = arith.constant 2.560000e+02 : f32
    %132 = vector.broadcast %cst_53 : f32 to vector<8x1xf32>
    %133 = arith.divf %131, %132 : vector<8x1xf32>
    %134 = arith.mulf %129, %129 : vector<8x256xf32>
    %cst_54 = arith.constant dense<0.000000e+00> : vector<8xf32>
    %135 = vector.multi_reduction <add>, %134, %cst_54 [1] : vector<8x256xf32> to vector<8xf32>
    %136 = vector.shape_cast %135 : vector<8xf32> to vector<8x1xf32>
    %cst_55 = arith.constant 2.560000e+02 : f32
    %137 = vector.broadcast %cst_55 : f32 to vector<8x1xf32>
    %138 = arith.divf %136, %137 : vector<8x1xf32>
    %139 = arith.mulf %133, %133 : vector<8x1xf32>
    %140 = arith.subf %138, %139 : vector<8x1xf32>
    %cst_56 = arith.constant 0.000000e+00 : f32
    %141 = vector.broadcast %cst_56 : f32 to vector<8x1xf32>
    %142 = arith.maximumf %140, %141 : vector<8x1xf32>
    %143 = vector.broadcast %133 : vector<8x1xf32> to vector<8x256xf32>
    %144 = arith.subf %129, %143 : vector<8x256xf32>
    %cst_57 = arith.constant 9.99999974E-6 : f32
    %145 = vector.broadcast %cst_57 : f32 to vector<8x1xf32>
    %146 = arith.addf %142, %145 : vector<8x1xf32>
    %147 = math.rsqrt %146 : vector<8x1xf32>
    %148 = vector.broadcast %147 : vector<8x1xf32> to vector<8x256xf32>
    %149 = arith.mulf %144, %148 : vector<8x256xf32>
    %150 = arith.truncf %149 : vector<8x256xf32> to vector<8x256xbf16>
    %c0_58 = arith.constant 0 : index
    %c0_59 = arith.constant 0 : index
    %151 = vector.load %arg15[%c0_58, %c0_59] : memref<256x256xbf16, #tpu.memory_space<vmem>>, vector<256x256xbf16>
    %cst_60 = arith.constant dense<0.000000e+00> : vector<8x256xf32>
    %152 = tpu.matmul %150, %151, %cst_60 {dimension_numbers = #tpu.dot_dimension_numbers<[1], [0], [0], [1], [0, 0, 1, 1], [], []>} : vector<8x256xbf16>, vector<256x256xbf16>, vector<8x256xf32> -> vector<8x256xf32>
    %c0_61 = arith.constant 0 : index
    %c0_62 = arith.constant 0 : index
    %153 = vector.load %arg16[%c0_61, %c0_62] : memref<1x256xf32, #tpu.memory_space<vmem>>, vector<1x256xf32>
    %154 = vector.broadcast %153 : vector<1x256xf32> to vector<8x256xf32>
    %155 = arith.addf %152, %154 : vector<8x256xf32>
    %156 = arith.negf %155 : vector<8x256xf32>
    %157 = math.exp %156 : vector<8x256xf32>
    %cst_63 = arith.constant 1.000000e+00 : f32
    %158 = vector.broadcast %cst_63 : f32 to vector<8x256xf32>
    %159 = arith.addf %158, %157 : vector<8x256xf32>
    %160 = arith.divf %158, %159 : vector<8x256xf32>
    %161 = arith.mulf %155, %160 : vector<8x256xf32>
    %cst_64 = arith.constant dense<0.000000e+00> : vector<8xf32>
    %162 = vector.multi_reduction <add>, %161, %cst_64 [1] : vector<8x256xf32> to vector<8xf32>
    %163 = vector.shape_cast %162 : vector<8xf32> to vector<8x1xf32>
    %cst_65 = arith.constant 2.560000e+02 : f32
    %164 = vector.broadcast %cst_65 : f32 to vector<8x1xf32>
    %165 = arith.divf %163, %164 : vector<8x1xf32>
    %166 = arith.mulf %161, %161 : vector<8x256xf32>
    %cst_66 = arith.constant dense<0.000000e+00> : vector<8xf32>
    %167 = vector.multi_reduction <add>, %166, %cst_66 [1] : vector<8x256xf32> to vector<8xf32>
    %168 = vector.shape_cast %167 : vector<8xf32> to vector<8x1xf32>
    %cst_67 = arith.constant 2.560000e+02 : f32
    %169 = vector.broadcast %cst_67 : f32 to vector<8x1xf32>
    %170 = arith.divf %168, %169 : vector<8x1xf32>
    %171 = arith.mulf %165, %165 : vector<8x1xf32>
    %172 = arith.subf %170, %171 : vector<8x1xf32>
    %cst_68 = arith.constant 0.000000e+00 : f32
    %173 = vector.broadcast %cst_68 : f32 to vector<8x1xf32>
    %174 = arith.maximumf %172, %173 : vector<8x1xf32>
    %175 = vector.broadcast %165 : vector<8x1xf32> to vector<8x256xf32>
    %176 = arith.subf %161, %175 : vector<8x256xf32>
    %cst_69 = arith.constant 9.99999974E-6 : f32
    %177 = vector.broadcast %cst_69 : f32 to vector<8x1xf32>
    %178 = arith.addf %174, %177 : vector<8x1xf32>
    %179 = math.rsqrt %178 : vector<8x1xf32>
    %180 = vector.broadcast %179 : vector<8x1xf32> to vector<8x256xf32>
    %181 = arith.mulf %176, %180 : vector<8x256xf32>
    %182 = arith.truncf %181 : vector<8x256xf32> to vector<8x256xbf16>
    %c0_70 = arith.constant 0 : index
    %c0_71 = arith.constant 0 : index
    %183 = vector.load %arg17[%c0_70, %c0_71] : memref<256x128xbf16, #tpu.memory_space<vmem>>, vector<256x128xbf16>
    %cst_72 = arith.constant dense<0.000000e+00> : vector<8x128xf32>
    %184 = tpu.matmul %182, %183, %cst_72 {dimension_numbers = #tpu.dot_dimension_numbers<[1], [0], [0], [1], [0, 0, 1, 1], [], []>} : vector<8x256xbf16>, vector<256x128xbf16>, vector<8x128xf32> -> vector<8x128xf32>
    %c0_73 = arith.constant 0 : index
    %c0_74 = arith.constant 0 : index
    %185 = vector.load %arg18[%c0_73, %c0_74] : memref<1x128xf32, #tpu.memory_space<vmem>>, vector<1x128xf32>
    %186 = vector.broadcast %185 : vector<1x128xf32> to vector<8x128xf32>
    %187 = arith.addf %184, %186 : vector<8x128xf32>
    %c0_75 = arith.constant 0 : index
    %c0_76 = arith.constant 0 : index
    %188 = vector.load %arg19[%c0_75, %c0_76] : memref<8x128xf32, #tpu.memory_space<vmem>>, vector<8x128xf32>
    tpu.vector_store %arg19[%c0_75, %c0_76], %187 {strides = array<i32>} : memref<8x128xf32, #tpu.memory_space<vmem>>, vector<8x128xf32>,
    return
  }
  func.func @transform_0(%arg0: i32) -> (i32, i32) {
    %c0_i32 = arith.constant 0 : i32
    %c0_i32_0 = arith.constant 0 : i32
    return %arg0, %c0_i32 : i32, i32
  }
  func.func @transform_1(%arg0: i32) -> (i32, i32) {
    %c0_i32 = arith.constant 0 : i32
    %c0_i32_0 = arith.constant 0 : i32
    %c0_i32_1 = arith.constant 0 : i32
    return %c0_i32, %c0_i32_0 : i32, i32
  }
  func.func @transform_2(%arg0: i32) -> (i32, i32) {
    %c0_i32 = arith.constant 0 : i32
    %c0_i32_0 = arith.constant 0 : i32
    %c0_i32_1 = arith.constant 0 : i32
    return %c0_i32, %c0_i32_0 : i32, i32
  }
  func.func @transform_3(%arg0: i32) -> (i32, i32) {
    %c0_i32 = arith.constant 0 : i32
    %c0_i32_0 = arith.constant 0 : i32
    %c0_i32_1 = arith.constant 0 : i32
    return %c0_i32, %c0_i32_0 : i32, i32
  }
  func.func @transform_4(%arg0: i32) -> (i32, i32) {
    %c0_i32 = arith.constant 0 : i32
    %c0_i32_0 = arith.constant 0 : i32
    %c0_i32_1 = arith.constant 0 : i32
    return %c0_i32, %c0_i32_0 : i32, i32
  }
  func.func @transform_5(%arg0: i32) -> (i32, i32) {
    %c0_i32 = arith.constant 0 : i32
    %c0_i32_0 = arith.constant 0 : i32
    %c0_i32_1 = arith.constant 0 : i32
    return %c0_i32, %c0_i32_0 : i32, i32
  }
  func.func @transform_6(%arg0: i32) -> (i32, i32) {
    %c0_i32 = arith.constant 0 : i32
    %c0_i32_0 = arith.constant 0 : i32
    %c0_i32_1 = arith.constant 0 : i32
    return %c0_i32, %c0_i32_0 : i32, i32
  }
  func.func @transform_7(%arg0: i32) -> (i32, i32) {
    %c0_i32 = arith.constant 0 : i32
    %c0_i32_0 = arith.constant 0 : i32
    %c0_i32_1 = arith.constant 0 : i32
    return %c0_i32, %c0_i32_0 : i32, i32
  }
  func.func @transform_8(%arg0: i32) -> (i32, i32) {
    %c0_i32 = arith.constant 0 : i32
    %c0_i32_0 = arith.constant 0 : i32
    %c0_i32_1 = arith.constant 0 : i32
    return %c0_i32, %c0_i32_0 : i32, i32
  }
  func.func @transform_9(%arg0: i32) -> (i32, i32) {
    %c0_i32 = arith.constant 0 : i32
    %c0_i32_0 = arith.constant 0 : i32
    %c0_i32_1 = arith.constant 0 : i32
    return %c0_i32, %c0_i32_0 : i32, i32
  }
  func.func @transform_10(%arg0: i32) -> (i32, i32) {
    %c0_i32 = arith.constant 0 : i32
    %c0_i32_0 = arith.constant 0 : i32
    %c0_i32_1 = arith.constant 0 : i32
    return %c0_i32, %c0_i32_0 : i32, i32
  }
  func.func @transform_11(%arg0: i32) -> (i32, i32) {
    %c0_i32 = arith.constant 0 : i32
    %c0_i32_0 = arith.constant 0 : i32
    %c0_i32_1 = arith.constant 0 : i32
    return %c0_i32, %c0_i32_0 : i32, i32
  }
  func.func @transform_12(%arg0: i32) -> (i32, i32) {
    %c0_i32 = arith.constant 0 : i32
    %c0_i32_0 = arith.constant 0 : i32
    %c0_i32_1 = arith.constant 0 : i32
    return %c0_i32, %c0_i32_0 : i32, i32
  }
  func.func @transform_13(%arg0: i32) -> (i32, i32) {
    %c0_i32 = arith.constant 0 : i32
    %c0_i32_0 = arith.constant 0 : i32
    %c0_i32_1 = arith.constant 0 : i32
    return %c0_i32, %c0_i32_0 : i32, i32
  }
  func.func @transform_14(%arg0: i32) -> (i32, i32) {
    %c0_i32 = arith.constant 0 : i32
    %c0_i32_0 = arith.constant 0 : i32
    %c0_i32_1 = arith.constant 0 : i32
    return %c0_i32, %c0_i32_0 : i32, i32
  }
  func.func @transform_15(%arg0: i32) -> (i32, i32) {
    %c0_i32 = arith.constant 0 : i32
    %c0_i32_0 = arith.constant 0 : i32
    %c0_i32_1 = arith.constant 0 : i32
    return %c0_i32, %c0_i32_0 : i32, i32
  }
  func.func @transform_16(%arg0: i32) -> (i32, i32) {
    %c0_i32 = arith.constant 0 : i32
    %c0_i32_0 = arith.constant 0 : i32
    %c0_i32_1 = arith.constant 0 : i32
    return %c0_i32, %c0_i32_0 : i32, i32
  }
  func.func @transform_17(%arg0: i32) -> (i32, i32) {
    %c0_i32 = arith.constant 0 : i32
    %c0_i32_0 = arith.constant 0 : i32
    %c0_i32_1 = arith.constant 0 : i32
    return %c0_i32, %c0_i32_0 : i32, i32
  }
  func.func @transform_18(%arg0: i32) -> (i32, i32) {
    %c0_i32 = arith.constant 0 : i32
    %c0_i32_0 = arith.constant 0 : i32
    return %arg0, %c0_i32 : i32, i32
  }
}

</mosaic_0001>

<llo_original>
// kernel: tpu_custom_call.1
$region0: #{tpu_custom_call.1}
  #allocation0 [shape = 'u32[]', space=smem, size = 0x4, offset = 0x4, fixed_abs, tag = 'smem constant byte address 0x4 - core index']
  #allocation1 [shape = 'u32[144,128]{1,0:T(1,128)}', space=vmem, size = 0x12000, scoped, tag = 'internal scratch']
  %s0 = inlined_call_operand.vmem [shape: f32[8,128], index: 0, kind: input, shape index: {}]
  %s1 = inlined_call_operand.hbm [shape: bf16[64,64], index: 1, kind: input, shape index: {}]
  %s2 = inlined_call_operand.vmem [shape: f32[1,64], index: 2, kind: input, shape index: {}]
  %s3 = inlined_call_operand.hbm [shape: bf16[64,128], index: 3, kind: input, shape index: {}]
  %s4 = inlined_call_operand.vmem [shape: f32[1,128], index: 4, kind: input, shape index: {}]
  %s5 = inlined_call_operand.vmem [shape: bf16[128,64], index: 5, kind: input, shape index: {}]
  %s6 = inlined_call_operand.vmem [shape: f32[1,64], index: 6, kind: input, shape index: {}]
  %s7 = inlined_call_operand.hbm [shape: bf16[64,128], index: 7, kind: input, shape index: {}]
  %s8 = inlined_call_operand.vmem [shape: f32[1,128], index: 8, kind: input, shape index: {}]
  %s9 = inlined_call_operand.hbm [shape: bf16[128,768], index: 9, kind: input, shape index: {}]
  %s10 = inlined_call_operand.hbm [shape: bf16[128,768], index: 10, kind: input, shape index: {}]
  %s11 = inlined_call_operand.vmem [shape: f32[1,768], index: 11, kind: input, shape index: {}]
  %s12 = inlined_call_operand.hbm [shape: bf16[256,256], index: 12, kind: input, shape index: {}]
  %s13 = inlined_call_operand.vmem [shape: f32[1,256], index: 13, kind: input, shape index: {}]
  %s14 = inlined_call_operand.hbm [shape: bf16[256,256], index: 14, kind: input, shape index: {}]
  %s15 = inlined_call_operand.vmem [shape: f32[1,256], index: 15, kind: input, shape index: {}]
  %s16 = inlined_call_operand.vmem [shape: bf16[256,128], index: 16, kind: input, shape index: {}]
  %s17 = inlined_call_operand.vmem [shape: f32[1,128], index: 17, kind: input, shape index: {}]
  %s18 = inlined_call_operand.hbm [shape: f32[8,128], index: 18, kind: output, shape index: {}]
  %s19 = sld [smem:[#allocation0]]
  $region110: #{tpu_custom_call.1} parent=0
    _
  %s21 = ssub.s32 1, %s19
  %s22 = scalar_select 0, %s21, %s19
  $region1: #{tpu_custom_call.1} parent=0
    #allocation2 [shape = 'u8[16384]{0}', space=vmem, size = 0x4000, scoped, tag = 'input window, operand 1, single buffered']
    #allocation3 [shape = 's32[1]{0}', space=sflag, size = 0x4, scoped, tag = 'scoped memory for tpu_custom_call.1']
    #allocation4 [shape = 's32[1]{0}', space=sflag, size = 0x4, scoped, tag = 'scoped memory for tpu_custom_call.1']
    #allocation5 [shape = 'u8[16384]{0}', space=vmem, size = 0x4000, scoped, tag = 'input window, operand 3, single buffered']
    #allocation6 [shape = 's32[1]{0}', space=sflag, size = 0x4, scoped, tag = 'scoped memory for tpu_custom_call.1']
    #allocation7 [shape = 'u8[16384]{0}', space=vmem, size = 0x4000, scoped, tag = 'input window, operand 7, single buffered']
    #allocation8 [shape = 'u8[196608]{0}', space=vmem, size = 0x30000, scoped, tag = 'input window, operand 9, single buffered']
    #allocation9 [shape = 's32[1]{0}', space=sflag, size = 0x4, scoped, tag = 'scoped memory for tpu_custom_call.1']
    #allocation10 [shape = 'u8[196608]{0}', space=vmem, size = 0x30000, scoped, tag = 'input window, operand 10, single buffered']
    #allocation11 [shape = 'u8[131072]{0}', space=vmem, size = 0x20000, scoped, tag = 'input window, operand 12, single buffered']
    #allocation12 [shape = 's32[1]{0}', space=sflag, size = 0x4, scoped, tag = 'scoped memory for tpu_custom_call.1']
    #allocation13 [shape = 'u8[131072]{0}', space=vmem, size = 0x20000, scoped, tag = 'input window, operand 14, single buffered']
    #allocation14 [shape = 'u8[4096]{0}', space=vmem, size = 0x1000, scoped, tag = 'output window, operand 0, single buffered']
    %23 = vsyncpa [#allocation3], 0
    %24 = vsyncpa [#allocation6], 0
    %25 = vsyncpa [#allocation9], 0
    %26 = vsyncpa [#allocation12], 0
    %27 = vsyncpa [#allocation4], 0
    // Predicated region
    $region2: #{tpu_custom_call.1} parent=1 // pred_check
      _
    $region3: #{tpu_custom_call.1} parent=1 // pred_check_branch
      %29 = sbr.rel (0) target = $region5
    $region4: #{tpu_custom_call.1} parent=1 // pred_region
      _
    $region5: #{tpu_custom_call.1} parent=1 // pred_fallthru
      _
    // Predicated region
    $region6: #{tpu_custom_call.1} parent=1 // pred_check
      _
    $region7: #{tpu_custom_call.1} parent=1 // pred_check_branch
      %31 = sbr.rel (0) target = $region9
    $region8: #{tpu_custom_call.1} parent=1 // pred_region
      %s33 = ssub.s32 512, 512
      %34 = vsyncadd [#allocation3], %s33
      %s35 = sshll.u32 [#allocation2], 4
      %s36 = int_to_ptr.vmem [resolvable:$true] %s35
      %41 = dma.hbm_to_vmem [thread:$0]  %s1, 512, %s36, [#allocation3], 64, 64, 4
    $region9: #{tpu_custom_call.1} parent=1 // pred_fallthru
      _
    // Predicated region
    $region10: #{tpu_custom_call.1} parent=1 // pred_check
      _
    $region11: #{tpu_custom_call.1} parent=1 // pred_check_branch
      %43 = sbr.rel (0) target = $region13
    $region12: #{tpu_custom_call.1} parent=1 // pred_region
      _
    $region13: #{tpu_custom_call.1} parent=1 // pred_fallthru
      _
    // Predicated region
    $region14: #{tpu_custom_call.1} parent=1 // pred_check
      _
    $region15: #{tpu_custom_call.1} parent=1 // pred_check_branch
      %45 = sbr.rel (0) target = $region17
    $region16: #{tpu_custom_call.1} parent=1 // pred_region
      %s47 = ssub.s32 512, 512
      %48 = vsyncadd [#allocation6], %s47
      %s49 = sshll.u32 [#allocation5], 4
      %s50 = int_to_ptr.vmem [resolvable:$true] %s49
      %55 = dma.hbm_to_vmem [thread:$0]  %s3, 512, %s50, [#allocation6], 64, 64, 4
    $region17: #{tpu_custom_call.1} parent=1 // pred_fallthru
      _
    // Predicated region
    $region18: #{tpu_custom_call.1} parent=1 // pred_check
      _
    $region19: #{tpu_custom_call.1} parent=1 // pred_check_branch
      %57 = sbr.rel (0) target = $region21
    $region20: #{tpu_custom_call.1} parent=1 // pred_region
      _
    $region21: #{tpu_custom_call.1} parent=1 // pred_fallthru
      _
    // Predicated region
    $region22: #{tpu_custom_call.1} parent=1 // pred_check
      _
    $region23: #{tpu_custom_call.1} parent=1 // pred_check_branch
      %59 = sbr.rel (0) target = $region25
    $region24: #{tpu_custom_call.1} parent=1 // pred_region
      _
    $region25: #{tpu_custom_call.1} parent=1 // pred_fallthru
      _
    // Predicated region
    $region26: #{tpu_custom_call.1} parent=1 // pred_check
      _
    $region27: #{tpu_custom_call.1} parent=1 // pred_check_branch
      %61 = sbr.rel (0) target = $region29
    $region28: #{tpu_custom_call.1} parent=1 // pred_region
      _
    $region29: #{tpu_custom_call.1} parent=1 // pred_fallthru
      _
    // Predicated region
    $region30: #{tpu_custom_call.1} parent=1 // pred_check
      _
    $region31: #{tpu_custom_call.1} parent=1 // pred_check_branch
      %63 = sbr.rel (0) target = $region33
    $region32: #{tpu_custom_call.1} parent=1 // pred_region
      %s65 = ssub.s32 512, 512
      %66 = vsyncadd [#allocation6], %s65
      %s67 = sshll.u32 [#allocation7], 4
      %s68 = int_to_ptr.vmem [resolvable:$true] %s67
      %73 = dma.hbm_to_vmem [thread:$0]  %s7, 512, %s68, [#allocation6], 64, 64, 4
    $region33: #{tpu_custom_call.1} parent=1 // pred_fallthru
      _
    // Predicated region
    $region34: #{tpu_custom_call.1} parent=1 // pred_check
      _
    $region35: #{tpu_custom_call.1} parent=1 // pred_check_branch
      %75 = sbr.rel (0) target = $region37
    $region36: #{tpu_custom_call.1} parent=1 // pred_region
      _
    $region37: #{tpu_custom_call.1} parent=1 // pred_fallthru
      _
    // Predicated region
    $region38: #{tpu_custom_call.1} parent=1 // pred_check
      _
    $region39: #{tpu_custom_call.1} parent=1 // pred_check_branch
      %77 = sbr.rel (0) target = $region41
    $region40: #{tpu_custom_call.1} parent=1 // pred_region
      %s79 = ssub.s32 6144, 6144
      %80 = vsyncadd [#allocation9], %s79
      %s81 = sshll.u32 [#allocation8], 4
      %s82 = int_to_ptr.vmem [resolvable:$true] %s81
      %87 = dma.hbm_to_vmem [thread:$0]  %s9, 6144, %s82, [#allocation9], 384, 384, 24
    $region41: #{tpu_custom_call.1} parent=1 // pred_fallthru
      _
    // Predicated region
    $region42: #{tpu_custom_call.1} parent=1 // pred_check
      _
    $region43: #{tpu_custom_call.1} parent=1 // pred_check_branch
      %89 = sbr.rel (0) target = $region45
    $region44: #{tpu_custom_call.1} parent=1 // pred_region
      %s91 = ssub.s32 6144, 6144
      %92 = vsyncadd [#allocation9], %s91
      %s93 = sshll.u32 [#allocation10], 4
      %s94 = int_to_ptr.vmem [resolvable:$true] %s93
      %99 = dma.hbm_to_vmem [thread:$0]  %s10, 6144, %s94, [#allocation9], 384, 384, 24
    $region45: #{tpu_custom_call.1} parent=1 // pred_fallthru
      _
    // Predicated region
    $region46: #{tpu_custom_call.1} parent=1 // pred_check
      _
    $region47: #{tpu_custom_call.1} parent=1 // pred_check_branch
      %101 = sbr.rel (0) target = $region49
    $region48: #{tpu_custom_call.1} parent=1 // pred_region
      _
    $region49: #{tpu_custom_call.1} parent=1 // pred_fallthru
      _
    // Predicated region
    $region50: #{tpu_custom_call.1} parent=1 // pred_check
      _
    $region51: #{tpu_custom_call.1} parent=1 // pred_check_branch
      %103 = sbr.rel (0) target = $region53
    $region52: #{tpu_custom_call.1} parent=1 // pred_region
      %s105 = ssub.s32 4096, 4096
      %106 = vsyncadd [#allocation12], %s105
      %s107 = sshll.u32 [#allocation11], 4
      %s108 = int_to_ptr.vmem [resolvable:$true] %s107
      %113 = dma.hbm_to_vmem [thread:$0]  %s12, 4096, %s108, [#allocation12], 128, 128, 8
    $region53: #{tpu_custom_call.1} parent=1 // pred_fallthru
      _
    // Predicated region
    $region54: #{tpu_custom_call.1} parent=1 // pred_check
      _
    $region55: #{tpu_custom_call.1} parent=1 // pred_check_branch
      %115 = sbr.rel (0) target = $region57
    $region56: #{tpu_custom_call.1} parent=1 // pred_region
      _
    $region57: #{tpu_custom_call.1} parent=1 // pred_fallthru
      _
    // Predicated region
    $region58: #{tpu_custom_call.1} parent=1 // pred_check
      _
    $region59: #{tpu_custom_call.1} parent=1 // pred_check_branch
      %117 = sbr.rel (0) target = $region61
    $region60: #{tpu_custom_call.1} parent=1 // pred_region
      %s119 = ssub.s32 4096, 4096
      %120 = vsyncadd [#allocation12], %s119
      %s121 = sshll.u32 [#allocation13], 4
      %s122 = int_to_ptr.vmem [resolvable:$true] %s121
      %127 = dma.hbm_to_vmem [thread:$0]  %s14, 4096, %s122, [#allocation12], 128, 128, 8
    $region61: #{tpu_custom_call.1} parent=1 // pred_fallthru
      _
    // Predicated region
    $region62: #{tpu_custom_call.1} parent=1 // pred_check
      _
    $region63: #{tpu_custom_call.1} parent=1 // pred_check_branch
      %129 = sbr.rel (0) target = $region65
    $region64: #{tpu_custom_call.1} parent=1 // pred_region
      _
    $region65: #{tpu_custom_call.1} parent=1 // pred_fallthru
      _
    // Predicated region
    $region66: #{tpu_custom_call.1} parent=1 // pred_check
      _
    $region67: #{tpu_custom_call.1} parent=1 // pred_check_branch
      %131 = sbr.rel (0) target = $region69
    $region68: #{tpu_custom_call.1} parent=1 // pred_region
      _
    $region69: #{tpu_custom_call.1} parent=1 // pred_fallthru
      _
    // Predicated region
    $region70: #{tpu_custom_call.1} parent=1 // pred_check
      _
    $region71: #{tpu_custom_call.1} parent=1 // pred_check_branch
      %133 = sbr.rel (0) target = $region73
    $region72: #{tpu_custom_call.1} parent=1 // pred_region
      _
    $region73: #{tpu_custom_call.1} parent=1 // pred_fallthru
      _
    // Predicated region
    $region74: #{tpu_custom_call.1} parent=1 // pred_check
      _
    $region75: #{tpu_custom_call.1} parent=1 // pred_check_branch
      %135 = sbr.rel (0) target = $region77
    $region76: #{tpu_custom_call.1} parent=1 // pred_region
      %136 = dma.done [#allocation3], 512
    $region77: #{tpu_custom_call.1} parent=1 // pred_fallthru
      _
    // Predicated region
    $region78: #{tpu_custom_call.1} parent=1 // pred_check
      _
    $region79: #{tpu_custom_call.1} parent=1 // pred_check_branch
      %138 = sbr.rel (0) target = $region81
    $region80: #{tpu_custom_call.1} parent=1 // pred_region
      %139 = dma.done [#allocation6], 512
    $region81: #{tpu_custom_call.1} parent=1 // pred_fallthru
      _
    // Predicated region
    $region82: #{tpu_custom_call.1} parent=1 // pred_check
      _
    $region83: #{tpu_custom_call.1} parent=1 // pred_check_branch
      %141 = sbr.rel (0) target = $region85
    $region84: #{tpu_custom_call.1} parent=1 // pred_region
      %142 = dma.done [#allocation6], 512
    $region85: #{tpu_custom_call.1} parent=1 // pred_fallthru
      _
    // Predicated region
    $region86: #{tpu_custom_call.1} parent=1 // pred_check
      _
    $region87: #{tpu_custom_call.1} parent=1 // pred_check_branch
      %144 = sbr.rel (0) target = $region89
    $region88: #{tpu_custom_call.1} parent=1 // pred_region
      %145 = dma.done [#allocation9], 6144
    $region89: #{tpu_custom_call.1} parent=1 // pred_fallthru
      _
    // Predicated region
    $region90: #{tpu_custom_call.1} parent=1 // pred_check
      _
    $region91: #{tpu_custom_call.1} parent=1 // pred_check_branch
      %147 = sbr.rel (0) target = $region93
    $region92: #{tpu_custom_call.1} parent=1 // pred_region
      %148 = dma.done [#allocation9], 6144
    $region93: #{tpu_custom_call.1} parent=1 // pred_fallthru
      _
    // Predicated region
    $region94: #{tpu_custom_call.1} parent=1 // pred_check
      _
    $region95: #{tpu_custom_call.1} parent=1 // pred_check_branch
      %150 = sbr.rel (0) target = $region97
    $region96: #{tpu_custom_call.1} parent=1 // pred_region
      %151 = dma.done [#allocation12], 4096
    $region97: #{tpu_custom_call.1} parent=1 // pred_fallthru
      _
    // Predicated region
    $region98: #{tpu_custom_call.1} parent=1 // pred_check
      _
    $region99: #{tpu_custom_call.1} parent=1 // pred_check_branch
      %153 = sbr.rel (0) target = $region101
    $region100: #{tpu_custom_call.1} parent=1 // pred_region
      %154 = dma.done [#allocation12], 4096
    $region101: #{tpu_custom_call.1} parent=1 // pred_fallthru
      _
    %v156 = vld [vmem:[%s0] sm:$0xff]
    %v157 = vand.u32 2147483647, %v156
    %vm158 = vcmp.le.f32.partialorder %v157, 0.7853982
    %vm159 = vcmp.lt.s32.totalorder %v156, 0
    %v160 = vand.u32 %v156, 2139095040
    %v161 = vshrl.u32 %v160, 23
    %v162 = vsub.s32 %v161, 127
    %v163 = vand.u32 2147483647, %v156
    %v164 = vand.u32 %v163, 8388607
    %v165 = vor.u32 %v164, 8388608
    %v166 = vsub.s32 0, %v165
    %v167 = vadd.s32 %v162, 1
    %vm168 = vcmp.gt.s32.totalorder %v167, 0
    %v169 = vsel %vm168, %v167, 0
    %v170 = vshrl.u32 %v169, 5
    %v171 = vand.u32 %v169, 31
    %v172 = vsub.s32 32, %v171
    %v173 = vshrl.u32 683565275, %v172
    %v174 = vshll.u32 683565275, %v171
    %v175 = vshrl.u32 2475754826, %v172
    %v176 = vor.u32 %v174, %v175
    %v177 = vshll.u32 2475754826, %v171
    %v178 = vshrl.u32 2131351028, %v172
    %v179 = vor.u32 %v177, %v178
    %v180 = vshll.u32 2131351028, %v171
    %v181 = vshrl.u32 2102212464, %v172
    %v182 = vor.u32 %v180, %v181
    %v183 = vshll.u32 2102212464, %v171
    %v184 = vshrl.u32 920167782, %v172
    %v185 = vor.u32 %v183, %v184
    %v186 = vshll.u32 920167782, %v171
    %v187 = vshrl.u32 1326507024, %v172
    %v188 = vor.u32 %v186, %v187
    %vm189 = vcmp.lt.s32.totalorder %v170, 1
    %vm190 = vcmp.lt.s32.totalorder %v170, 2
    %vm191 = vcmp.lt.s32.totalorder %v170, 3
    %vm192 = vcmp.lt.s32.totalorder %v170, 4
    %v193 = vsel %vm189, %v173, %v176
    %v194 = vsel %vm192, %v182, 2102212464
    %v195 = vsel %vm191, %v179, %v194
    %v196 = vsel %vm190, %v193, %v195
    %v197 = vsel %vm189, %v176, %v179
    %v198 = vsel %vm192, %v185, 920167782
    %v199 = vsel %vm191, %v182, %v198
    %v200 = vsel %vm190, %v197, %v199
    %v201 = vsel %vm189, %v179, %v182
    %v202 = vsel %vm192, %v188, 1326507024
    %v203 = vsel %vm191, %v185, %v202
    %v204 = vsel %vm190, %v201, %v203
    %v205 = vshll.u32 %v165, 8
    %v206 = vmul.u32.u64.compose %v205, %v204
    %v207 = vextract.low.u32 %v206
    %v208 = vextract.high.u32 %v206
    %v209 = vmul.u32.u64.compose %v205, %v200
    %v210 = vextract.low.u32 %v209
    %v211 = vextract.high.u32 %v209
    %v212 = vmul.u32 %v205, %v196
    %v213 = vadd.s32 %v208, %v210
    %vm214 = vc.u32 %v208, %v210
    %v215 = vadd.s32 %v211, 1
    %v216 = vsel %vm214, %v215, %v211
    %v217 = vadd.s32 %v212, %v216
    %v218 = vadd.s32 %v217, 536870912
    %v219 = vshrl.u32 %v218, 30
    %v220 = vshll.u32 %v219, 30
    %v221 = vsub.s32 %v217, %v220
    %vm222 = vcmp.lt.s32.totalorder %v221, 0
    %v223 = vsub.s32 0, %v221
    %v224 = vsel %vm222, %v223, %v221
    %v225 = vclz %v224
    %v226 = vsub.s32 %v225, 2
    %vm227 = vcmp.gt.s32.totalorder 0, %v226
    %v228 = vsel %vm227, 0, %v226
    %v229 = vsub.s32 32, %v228
    %v230 = vshll.u32 %v221, %v228
    %v231 = vshrl.u32 %v213, %v229
    %v232 = vor.u32 %v230, %v231
    %v233 = vsub.s32 4294967266, %v228
    %v234 = vadd.s32 %v233, 127
    %v235 = vshll.u32 %v234, 23
    %v236 = vor.u32 4788187, %v235
    %v237 = vand.u32 2147483647, %v236
    %v239 = vcvt.s32.f32 %v232
    %v240 = vmul.f32 %v239, %v237
    %v241 = vxor.u32 %v240, 2147483648
    %v242 = vsel %vm159, %v241, %v240
    %v243 = vsub.s32 4, %v219
    %v244 = vsel %vm159, %v243, %v219
    %v245 = vsel %vm158, %v156, %v242
    %v246 = vsel %vm158, 0, %v244
    %v247 = vcosq.f32.pop %v245
    %v248 = vsinq.f32.pop %v245
    %vm249 = vweird.f32 %v156
    %v250 = vadd.s32 %v246, 3
    %v251 = vand.u32 %v250, 3
    %vm252 = vcmp.lt.s32.totalorder %v251, 2
    %vm253 = vcmp.eq.s32.totalorder %v251, 0
    %v254 = vxor.u32 %v248, 2147483648
    %v255 = vsel %vm253, %v247, %v254
    %vm256 = vcmp.eq.s32.totalorder %v251, 2
    %v257 = vxor.u32 %v247, 2147483648
    %v258 = vsel %vm256, %v257, %v248
    %v259 = vsel %vm252, %v255, %v258
    %v260 = vsel %vm249, nan, %v259
    %v261 = vpack.c.bf16 %v260, %v260
    %v262 = vld [vmem:[#allocation2] sm:$0xf]
    %v263 = vld [vmem:[#allocation2 + $0x4] sm:$0xf]
    %v264 = vld [vmem:[#allocation2 + $0x8] sm:$0xf]
    %v265 = vld [vmem:[#allocation2 + $0xc] sm:$0xf]
    %v266 = vld [vmem:[#allocation2 + $0x10] sm:$0xf]
    %v267 = vld [vmem:[#allocation2 + $0x14] sm:$0xf]
    %v268 = vld [vmem:[#allocation2 + $0x18] sm:$0xf]
    %v269 = vld [vmem:[#allocation2 + $0x1c] sm:$0xf]
    %v270 = vld [vmem:[%s2] sm:$0x1]
    %v272 = vlaneseq
    %v273 = vshrl.u32 %v272, 7
    %v274 = vsub.s32 0, %v273
    %v275 = vrot.slane %v270, %v274
    %v285 = vunpack.c.l.b16 %v262
    %v286 = vunpack.c.l.b16 %v263
    %v287 = vunpack.c.l.b16 %v264
    %v288 = vunpack.c.l.b16 %v265
    %v289 = vunpack.c.l.b16 %v266
    %v290 = vunpack.c.l.b16 %v267
    %v291 = vunpack.c.l.b16 %v268
    %v292 = vunpack.c.l.b16 %v269
    %v293 = vpack.c.b16 %v286, %v285
    %v294 = vpack.c.b16 %v288, %v287
    %v295 = vpack.c.b16 %v290, %v289
    %v296 = vpack.c.b16 %v292, %v291
    %vm301 = vcmask 523264
    %v303 = vsel %vm301, %v261, 0
    %305 = vmatprep.subr.bf16.mxu0 0
    %306 = vmatpush1.bf16.msra.mxu0 %v293
    %307 = vmatprep.subr.bf16.mxu0 0
    %308 = vmatpush1.bf16.msra.mxu0 %v294
    %309 = vmatprep.subr.bf16.mxu0 0
    %310 = vmatpush1.bf16.msra.mxu0 %v295
    %311 = vmatprep.subr.bf16.mxu0 0
    %312 = vmatpush1.bf16.msra.mxu0 %v296
    %313 = vmatprep.subr.bf16.mxu0 0
    %314 = vmatpush1.bf16.msra.mxu0 0
    %315 = vmatprep.subr.bf16.mxu0 0
    %316 = vmatpush1.bf16.msra.mxu0 0
    %317 = vmatprep.subr.bf16.mxu0 0
    %318 = vmatpush1.bf16.msra.mxu0 0
    %319 = vmatprep.subr.bf16.mxu0 0
    %320 = vmatpush1.bf16.msra.mxu0 0
    %321 = vmatprep.subr.bf16.mxu0 0
    %322 = vmatpush1.bf16.msra.mxu0 0
    %323 = vmatprep.subr.bf16.mxu0 0
    %324 = vmatpush1.bf16.msra.mxu0 0
    %325 = vmatprep.subr.bf16.mxu0 0
    %326 = vmatpush1.bf16.msra.mxu0 0
    %327 = vmatprep.subr.bf16.mxu0 0
    %328 = vmatpush1.bf16.msra.mxu0 0
    %329 = vmatprep.subr.bf16.mxu0 0
    %330 = vmatpush1.bf16.msra.mxu0 0
    %331 = vmatprep.subr.bf16.mxu0 0
    %332 = vmatpush1.bf16.msra.mxu0 0
    %333 = vmatprep.subr.bf16.mxu0 0
    %334 = vmatpush1.bf16.msra.mxu0 0
    %335 = vmatprep.subr.bf16.mxu0 0
    %336 = vmatpush1.bf16.msra.mxu0 0
    %337 = vmatprep.mubr.bf16.mxu0 0
    %338 = vmatmul.mubr.bf16.gmra.mrb[0].mxu0 %v303
    %v339 = vpop.f32.mrb[0].mxu0
    %v340 = vadd.f32 %v275, %v339
    %v341 = vpop.f32.mrb[0].mxu0
    %v342 = vpop.f32.mrb[0].mxu0
    %v343 = vpop.f32.mrb[0].mxu0
    %344 = vdwg.mxu0
    %v345 = vxor.u32 %v340, 2147483648
    %v346 = vmul.f32 %v345, 1.442695
    %v347 = vpow.pop %v346
    %v348 = vadd.f32 %v347, 1.0
    %v349 = vrcp.pop %v348
    %v350 = vmul.f32 1.0, %v349
    %v351 = vmul.f32 %v340, %v350
    %v352 = vsel %vm301, %v351, 0.0
    %353 = vadd.xlane.f32.xlu0 %v352
    %v354 = vpop.xlane.xlu0 %353
    %v355 = vrcp.pop 64.0
    %v356 = vmul.f32 %v354, %v355
    %v357 = vmul.f32 %v351, %v351
    %v358 = vsel %vm301, %v357, 0.0
    %359 = vadd.xlane.f32.xlu0 %v358
    %v360 = vpop.xlane.xlu0 %359
    %v361 = vmul.f32 %v360, %v355
    %v362 = vmul.f32 %v356, %v356
    %v363 = vsub.f32 %v361, %v362
    %v364 = vmax.f32 %v363, 0.0
    %v365 = vsub.f32 %v351, %v356
    %v366 = vadd.f32 %v364, 1e-05
    %v367 = vrsqrt.pop %v366
    %v368 = vmul.f32 %v365, %v367
    %v369 = vpack.c.bf16 %v368, %v368
    %v370 = vld [vmem:[#allocation5] sm:$0xf]
    %v371 = vld [vmem:[#allocation5 + $0x4] sm:$0xf]
    %v372 = vld [vmem:[#allocation5 + $0x8] sm:$0xf]
    %v373 = vld [vmem:[#allocation5 + $0xc] sm:$0xf]
    %v374 = vld [vmem:[#allocation5 + $0x10] sm:$0xf]
    %v375 = vld [vmem:[#allocation5 + $0x14] sm:$0xf]
    %v376 = vld [vmem:[#allocation5 + $0x18] sm:$0xf]
    %v377 = vld [vmem:[#allocation5 + $0x1c] sm:$0xf]
    %v378 = vld [vmem:[%s4] sm:$0x1]
    %v380 = vlaneseq
    %v381 = vshrl.u32 %v380, 7
    %v382 = vsub.s32 0, %v381
    %v383 = vrot.slane %v378, %v382
    %v393 = vunpack.c.l.b16 %v370
    %v394 = vunpack.c.l.b16 %v371
    %v395 = vunpack.c.l.b16 %v372
    %v396 = vunpack.c.l.b16 %v373
    %v397 = vunpack.c.l.b16 %v374
    %v398 = vunpack.c.l.b16 %v375
    %v399 = vunpack.c.l.b16 %v376
    %v400 = vunpack.c.l.b16 %v377
    %v401 = vpack.c.b16 %v394, %v393
    %v402 = vpack.c.b16 %v396, %v395
    %v403 = vpack.c.b16 %v398, %v397
    %v404 = vpack.c.b16 %v400, %v399
    %v410 = vsel %vm301, %v369, 0
    %412 = vmatprep.subr.bf16.mxu0 0
    %413 = vmatpush1.bf16.msra.mxu0 %v401
    %414 = vmatprep.subr.bf16.mxu0 0
    %415 = vmatpush1.bf16.msra.mxu0 %v402
    %416 = vmatprep.subr.bf16.mxu0 0
    %417 = vmatpush1.bf16.msra.mxu0 %v403
    %418 = vmatprep.subr.bf16.mxu0 0
    %419 = vmatpush1.bf16.msra.mxu0 %v404
    %420 = vmatprep.subr.bf16.mxu0 0
    %421 = vmatpush1.bf16.msra.mxu0 0
    %422 = vmatprep.subr.bf16.mxu0 0
    %423 = vmatpush1.bf16.msra.mxu0 0
    %424 = vmatprep.subr.bf16.mxu0 0
    %425 = vmatpush1.bf16.msra.mxu0 0
    %426 = vmatprep.subr.bf16.mxu0 0
    %427 = vmatpush1.bf16.msra.mxu0 0
    %428 = vmatprep.subr.bf16.mxu0 0
    %429 = vmatpush1.bf16.msra.mxu0 0
    %430 = vmatprep.subr.bf16.mxu0 0
    %431 = vmatpush1.bf16.msra.mxu0 0
    %432 = vmatprep.subr.bf16.mxu0 0
    %433 = vmatpush1.bf16.msra.mxu0 0
    %434 = vmatprep.subr.bf16.mxu0 0
    %435 = vmatpush1.bf16.msra.mxu0 0
    %436 = vmatprep.subr.bf16.mxu0 0
    %437 = vmatpush1.bf16.msra.mxu0 0
    %438 = vmatprep.subr.bf16.mxu0 0
    %439 = vmatpush1.bf16.msra.mxu0 0
    %440 = vmatprep.subr.bf16.mxu0 0
    %441 = vmatpush1.bf16.msra.mxu0 0
    %442 = vmatprep.subr.bf16.mxu0 0
    %443 = vmatpush1.bf16.msra.mxu0 0
    %444 = vmatprep.mubr.bf16.mxu0 0
    %445 = vmatmul.mubr.bf16.gmra.mrb[0].mxu0 %v410
    %v446 = vpop.f32.mrb[0].mxu0
    %v447 = vadd.f32 %v383, %v446
    %v448 = vpop.f32.mrb[0].mxu0
    %v449 = vpop.f32.mrb[0].mxu0
    %v450 = vpop.f32.mrb[0].mxu0
    %451 = vdwg.mxu0
    %v452 = vxor.u32 %v447, 2147483648
    %v453 = vmul.f32 %v452, 1.442695
    %v454 = vpow.pop %v453
    %v455 = vadd.f32 %v454, 1.0
    %v456 = vrcp.pop %v455
    %v457 = vmul.f32 1.0, %v456
    %v458 = vmul.f32 %v447, %v457
    %v459 = vpack.c.bf16 %v156, %v156
    %v460 = vld [vmem:[%s5] sm:$0xf]
    %v461 = vld [vmem:[%s5 + $0x4] sm:$0xf]
    %v462 = vld [vmem:[%s5 + $0x8] sm:$0xf]
    %v463 = vld [vmem:[%s5 + $0xc] sm:$0xf]
    %v464 = vld [vmem:[%s5 + $0x10] sm:$0xf]
    %v465 = vld [vmem:[%s5 + $0x14] sm:$0xf]
    %v466 = vld [vmem:[%s5 + $0x18] sm:$0xf]
    %v467 = vld [vmem:[%s5 + $0x1c] sm:$0xf]
    %v468 = vld [vmem:[%s5 + $0x20] sm:$0xf]
    %v469 = vld [vmem:[%s5 + $0x24] sm:$0xf]
    %v470 = vld [vmem:[%s5 + $0x28] sm:$0xf]
    %v471 = vld [vmem:[%s5 + $0x2c] sm:$0xf]
    %v472 = vld [vmem:[%s5 + $0x30] sm:$0xf]
    %v473 = vld [vmem:[%s5 + $0x34] sm:$0xf]
    %v474 = vld [vmem:[%s5 + $0x38] sm:$0xf]
    %v475 = vld [vmem:[%s5 + $0x3c] sm:$0xf]
    %v476 = vld [vmem:[%s6] sm:$0x1]
    %v478 = vlaneseq
    %v479 = vshrl.u32 %v478, 7
    %v480 = vsub.s32 0, %v479
    %v481 = vrot.slane %v476, %v480
    %v499 = vunpack.c.l.b16 %v460
    %v500 = vunpack.c.l.b16 %v461
    %v501 = vunpack.c.l.b16 %v462
    %v502 = vunpack.c.l.b16 %v463
    %v503 = vunpack.c.l.b16 %v464
    %v504 = vunpack.c.l.b16 %v465
    %v505 = vunpack.c.l.b16 %v466
    %v506 = vunpack.c.l.b16 %v467
    %v507 = vunpack.c.l.b16 %v468
    %v508 = vunpack.c.l.b16 %v469
    %v509 = vunpack.c.l.b16 %v470
    %v510 = vunpack.c.l.b16 %v471
    %v511 = vunpack.c.l.b16 %v472
    %v512 = vunpack.c.l.b16 %v473
    %v513 = vunpack.c.l.b16 %v474
    %v514 = vunpack.c.l.b16 %v475
    %v515 = vpack.c.b16 %v500, %v499
    %v516 = vpack.c.b16 %v502, %v501
    %v517 = vpack.c.b16 %v504, %v503
    %v518 = vpack.c.b16 %v506, %v505
    %v519 = vpack.c.b16 %v508, %v507
    %v520 = vpack.c.b16 %v510, %v509
    %v521 = vpack.c.b16 %v512, %v511
    %v522 = vpack.c.b16 %v514, %v513
    %531 = vmatprep.subr.bf16.mxu0 0
    %532 = vmatpush1.bf16.msra.mxu0 %v515
    %533 = vmatprep.subr.bf16.mxu0 0
    %534 = vmatpush1.bf16.msra.mxu0 %v516
    %535 = vmatprep.subr.bf16.mxu0 0
    %536 = vmatpush1.bf16.msra.mxu0 %v517
    %537 = vmatprep.subr.bf16.mxu0 0
    %538 = vmatpush1.bf16.msra.mxu0 %v518
    %539 = vmatprep.subr.bf16.mxu0 0
    %540 = vmatpush1.bf16.msra.mxu0 %v519
    %541 = vmatprep.subr.bf16.mxu0 0
    %542 = vmatpush1.bf16.msra.mxu0 %v520
    %543 = vmatprep.subr.bf16.mxu0 0
    %544 = vmatpush1.bf16.msra.mxu0 %v521
    %545 = vmatprep.subr.bf16.mxu0 0
    %546 = vmatpush1.bf16.msra.mxu0 %v522
    %547 = vmatprep.subr.bf16.mxu0 0
    %548 = vmatpush1.bf16.msra.mxu0 0
    %549 = vmatprep.subr.bf16.mxu0 0
    %550 = vmatpush1.bf16.msra.mxu0 0
    %551 = vmatprep.subr.bf16.mxu0 0
    %552 = vmatpush1.bf16.msra.mxu0 0
    %553 = vmatprep.subr.bf16.mxu0 0
    %554 = vmatpush1.bf16.msra.mxu0 0
    %555 = vmatprep.subr.bf16.mxu0 0
    %556 = vmatpush1.bf16.msra.mxu0 0
    %557 = vmatprep.subr.bf16.mxu0 0
    %558 = vmatpush1.bf16.msra.mxu0 0
    %559 = vmatprep.subr.bf16.mxu0 0
    %560 = vmatpush1.bf16.msra.mxu0 0
    %561 = vmatprep.subr.bf16.mxu0 0
    %562 = vmatpush1.bf16.msra.mxu0 0
    %563 = vmatprep.mubr.bf16.mxu0 0
    %564 = vmatmul.mubr.bf16.gmra.mrb[0].mxu0 %v459
    %v565 = vpop.f32.mrb[0].mxu0
    %v566 = vadd.f32 %v481, %v565
    %v567 = vpop.f32.mrb[0].mxu0
    %v568 = vpop.f32.mrb[0].mxu0
    %v569 = vpop.f32.mrb[0].mxu0
    %570 = vdwg.mxu0
    %v571 = vxor.u32 %v566, 2147483648
    %v572 = vmul.f32 %v571, 1.442695
    %v573 = vpow.pop %v572
    %v574 = vadd.f32 %v573, 1.0
    %v575 = vrcp.pop %v574
    %v576 = vmul.f32 1.0, %v575
    %v577 = vmul.f32 %v566, %v576
    %v578 = vsel %vm301, %v577, 0.0
    %579 = vadd.xlane.f32.xlu0 %v578
    %v580 = vpop.xlane.xlu0 %579
    %v581 = vmul.f32 %v580, %v355
    %v582 = vmul.f32 %v577, %v577
    %v583 = vsel %vm301, %v582, 0.0
    %584 = vadd.xlane.f32.xlu0 %v583
    %v585 = vpop.xlane.xlu0 %584
    %v586 = vmul.f32 %v585, %v355
    %v587 = vmul.f32 %v581, %v581
    %v588 = vsub.f32 %v586, %v587
    %v589 = vmax.f32 %v588, 0.0
    %v590 = vsub.f32 %v577, %v581
    %v591 = vadd.f32 %v589, 1e-05
    %v592 = vrsqrt.pop %v591
    %v593 = vmul.f32 %v590, %v592
    %v594 = vpack.c.bf16 %v593, %v593
    %v595 = vld [vmem:[#allocation7] sm:$0xf]
    %v596 = vld [vmem:[#allocation7 + $0x4] sm:$0xf]
    %v597 = vld [vmem:[#allocation7 + $0x8] sm:$0xf]
    %v598 = vld [vmem:[#allocation7 + $0xc] sm:$0xf]
    %v599 = vld [vmem:[#allocation7 + $0x10] sm:$0xf]
    %v600 = vld [vmem:[#allocation7 + $0x14] sm:$0xf]
    %v601 = vld [vmem:[#allocation7 + $0x18] sm:$0xf]
    %v602 = vld [vmem:[#allocation7 + $0x1c] sm:$0xf]
    %v603 = vld [vmem:[%s8] sm:$0x1]
    %v605 = vlaneseq
    %v606 = vshrl.u32 %v605, 7
    %v607 = vsub.s32 0, %v606
    %v608 = vrot.slane %v603, %v607
    %v618 = vunpack.c.l.b16 %v595
    %v619 = vunpack.c.l.b16 %v596
    %v620 = vunpack.c.l.b16 %v597
    %v621 = vunpack.c.l.b16 %v598
    %v622 = vunpack.c.l.b16 %v599
    %v623 = vunpack.c.l.b16 %v600
    %v624 = vunpack.c.l.b16 %v601
    %v625 = vunpack.c.l.b16 %v602
    %v626 = vpack.c.b16 %v619, %v618
    %v627 = vpack.c.b16 %v621, %v620
    %v628 = vpack.c.b16 %v623, %v622
    %v629 = vpack.c.b16 %v625, %v624
    %v635 = vsel %vm301, %v594, 0
    %637 = vmatprep.subr.bf16.mxu0 0
    %638 = vmatpush1.bf16.msra.mxu0 %v626
    %639 = vmatprep.subr.bf16.mxu0 0
    %640 = vmatpush1.bf16.msra.mxu0 %v627
    %641 = vmatprep.subr.bf16.mxu0 0
    %642 = vmatpush1.bf16.msra.mxu0 %v628
    %643 = vmatprep.subr.bf16.mxu0 0
    %644 = vmatpush1.bf16.msra.mxu0 %v629
    %645 = vmatprep.subr.bf16.mxu0 0
    %646 = vmatpush1.bf16.msra.mxu0 0
    %647 = vmatprep.subr.bf16.mxu0 0
    %648 = vmatpush1.bf16.msra.mxu0 0
    %649 = vmatprep.subr.bf16.mxu0 0
    %650 = vmatpush1.bf16.msra.mxu0 0
    %651 = vmatprep.subr.bf16.mxu0 0
    %652 = vmatpush1.bf16.msra.mxu0 0
    %653 = vmatprep.subr.bf16.mxu0 0
    %654 = vmatpush1.bf16.msra.mxu0 0
    %655 = vmatprep.subr.bf16.mxu0 0
    %656 = vmatpush1.bf16.msra.mxu0 0
    %657 = vmatprep.subr.bf16.mxu0 0
    %658 = vmatpush1.bf16.msra.mxu0 0
    %659 = vmatprep.subr.bf16.mxu0 0
    %660 = vmatpush1.bf16.msra.mxu0 0
    %661 = vmatprep.subr.bf16.mxu0 0
    %662 = vmatpush1.bf16.msra.mxu0 0
    %663 = vmatprep.subr.bf16.mxu0 0
    %664 = vmatpush1.bf16.msra.mxu0 0
    %665 = vmatprep.subr.bf16.mxu0 0
    %666 = vmatpush1.bf16.msra.mxu0 0
    %667 = vmatprep.subr.bf16.mxu0 0
    %668 = vmatpush1.bf16.msra.mxu0 0
    %669 = vmatprep.mubr.bf16.mxu0 0
    %670 = vmatmul.mubr.bf16.gmra.mrb[0].mxu0 %v635
    %v671 = vpop.f32.mrb[0].mxu0
    %v672 = vadd.f32 %v608, %v671
    %v673 = vpop.f32.mrb[0].mxu0
    %v674 = vpop.f32.mrb[0].mxu0
    %v675 = vpop.f32.mrb[0].mxu0
    %676 = vdwg.mxu0
    %v677 = vxor.u32 %v672, 2147483648
    %v678 = vmul.f32 %v677, 1.442695
    %v679 = vpow.pop %v678
    %v680 = vadd.f32 %v679, 1.0
    %v681 = vrcp.pop %v680
    %v682 = vmul.f32 1.0, %v681
    %v683 = vmul.f32 %v672, %v682
    %v684 = vpack.c.bf16 %v683, %v683
    %v685 = vld [vmem:[#allocation8] sm:$0xff]
    %v686 = vld [vmem:[#allocation8 + $0x8] sm:$0xff]
    %v687 = vld [vmem:[#allocation8 + $0x10] sm:$0xff]
    %v688 = vld [vmem:[#allocation8 + $0x18] sm:$0xff]
    %v689 = vld [vmem:[#allocation8 + $0x20] sm:$0xff]
    %v690 = vld [vmem:[#allocation8 + $0x28] sm:$0xff]
    %v691 = vld [vmem:[#allocation8 + $0x30] sm:$0xff]
    %v692 = vld [vmem:[#allocation8 + $0x38] sm:$0xff]
    %v693 = vld [vmem:[#allocation8 + $0x40] sm:$0xff]
    %v694 = vld [vmem:[#allocation8 + $0x48] sm:$0xff]
    %v695 = vld [vmem:[#allocation8 + $0x50] sm:$0xff]
    %v696 = vld [vmem:[#allocation8 + $0x58] sm:$0xff]
    %v697 = vld [vmem:[#allocation8 + $0x60] sm:$0xff]
    %v698 = vld [vmem:[#allocation8 + $0x68] sm:$0xff]
    %v699 = vld [vmem:[#allocation8 + $0x70] sm:$0xff]
    %v700 = vld [vmem:[#allocation8 + $0x78] sm:$0xff]
    %v701 = vld [vmem:[#allocation8 + $0x80] sm:$0xff]
    %v702 = vld [vmem:[#allocation8 + $0x88] sm:$0xff]
    %v703 = vld [vmem:[#allocation8 + $0x90] sm:$0xff]
    %v704 = vld [vmem:[#allocation8 + $0x98] sm:$0xff]
    %v705 = vld [vmem:[#allocation8 + $0xa0] sm:$0xff]
    %v706 = vld [vmem:[#allocation8 + $0xa8] sm:$0xff]
    %v707 = vld [vmem:[#allocation8 + $0xb0] sm:$0xff]
    %v708 = vld [vmem:[#allocation8 + $0xb8] sm:$0xff]
    %v709 = vld [vmem:[#allocation8 + $0xc0] sm:$0xff]
    %v710 = vld [vmem:[#allocation8 + $0xc8] sm:$0xff]
    %v711 = vld [vmem:[#allocation8 + $0xd0] sm:$0xff]
    %v712 = vld [vmem:[#allocation8 + $0xd8] sm:$0xff]
    %v713 = vld [vmem:[#allocation8 + $0xe0] sm:$0xff]
    %v714 = vld [vmem:[#allocation8 + $0xe8] sm:$0xff]
    %v715 = vld [vmem:[#allocation8 + $0xf0] sm:$0xff]
    %v716 = vld [vmem:[#allocation8 + $0xf8] sm:$0xff]
    %v717 = vld [vmem:[#allocation8 + $0x100] sm:$0xff]
    %v718 = vld [vmem:[#allocation8 + $0x108] sm:$0xff]
    %v719 = vld [vmem:[#allocation8 + $0x110] sm:$0xff]
    %v720 = vld [vmem:[#allocation8 + $0x118] sm:$0xff]
    %v721 = vld [vmem:[#allocation8 + $0x120] sm:$0xff]
    %v722 = vld [vmem:[#allocation8 + $0x128] sm:$0xff]
    %v723 = vld [vmem:[#allocation8 + $0x130] sm:$0xff]
    %v724 = vld [vmem:[#allocation8 + $0x138] sm:$0xff]
    %v725 = vld [vmem:[#allocation8 + $0x140] sm:$0xff]
    %v726 = vld [vmem:[#allocation8 + $0x148] sm:$0xff]
    %v727 = vld [vmem:[#allocation8 + $0x150] sm:$0xff]
    %v728 = vld [vmem:[#allocation8 + $0x158] sm:$0xff]
    %v729 = vld [vmem:[#allocation8 + $0x160] sm:$0xff]
    %v730 = vld [vmem:[#allocation8 + $0x168] sm:$0xff]
    %v731 = vld [vmem:[#allocation8 + $0x170] sm:$0xff]
    %v732 = vld [vmem:[#allocation8 + $0x178] sm:$0xff]
    %v733 = vpack.c.bf16 %v458, %v458
    %v734 = vld [vmem:[#allocation10] sm:$0xff]
    %v735 = vld [vmem:[#allocation10 + $0x8] sm:$0xff]
    %v736 = vld [vmem:[#allocation10 + $0x10] sm:$0xff]
    %v737 = vld [vmem:[#allocation10 + $0x18] sm:$0xff]
    %v738 = vld [vmem:[#allocation10 + $0x20] sm:$0xff]
    %v739 = vld [vmem:[#allocation10 + $0x28] sm:$0xff]
    %v740 = vld [vmem:[#allocation10 + $0x30] sm:$0xff]
    %v741 = vld [vmem:[#allocation10 + $0x38] sm:$0xff]
    %v742 = vld [vmem:[#allocation10 + $0x40] sm:$0xff]
    %v743 = vld [vmem:[#allocation10 + $0x48] sm:$0xff]
    %v744 = vld [vmem:[#allocation10 + $0x50] sm:$0xff]
    %v745 = vld [vmem:[#allocation10 + $0x58] sm:$0xff]
    %v746 = vld [vmem:[#allocation10 + $0x60] sm:$0xff]
    %v747 = vld [vmem:[#allocation10 + $0x68] sm:$0xff]
    %v748 = vld [vmem:[#allocation10 + $0x70] sm:$0xff]
    %v749 = vld [vmem:[#allocation10 + $0x78] sm:$0xff]
    %v750 = vld [vmem:[#allocation10 + $0x80] sm:$0xff]
    %v751 = vld [vmem:[#allocation10 + $0x88] sm:$0xff]
    %v752 = vld [vmem:[#allocation10 + $0x90] sm:$0xff]
    %v753 = vld [vmem:[#allocation10 + $0x98] sm:$0xff]
    %v754 = vld [vmem:[#allocation10 + $0xa0] sm:$0xff]
    %v755 = vld [vmem:[#allocation10 + $0xa8] sm:$0xff]
    %v756 = vld [vmem:[#allocation10 + $0xb0] sm:$0xff]
    %v757 = vld [vmem:[#allocation10 + $0xb8] sm:$0xff]
    %v758 = vld [vmem:[#allocation10 + $0xc0] sm:$0xff]
    %v759 = vld [vmem:[#allocation10 + $0xc8] sm:$0xff]
    %v760 = vld [vmem:[#allocation10 + $0xd0] sm:$0xff]
    %v761 = vld [vmem:[#allocation10 + $0xd8] sm:$0xff]
    %v762 = vld [vmem:[#allocation10 + $0xe0] sm:$0xff]
    %v763 = vld [vmem:[#allocation10 + $0xe8] sm:$0xff]
    %v764 = vld [vmem:[#allocation10 + $0xf0] sm:$0xff]
    %v765 = vld [vmem:[#allocation10 + $0xf8] sm:$0xff]
    %v766 = vld [vmem:[#allocation10 + $0x100] sm:$0xff]
    %v767 = vld [vmem:[#allocation10 + $0x108] sm:$0xff]
    %v768 = vld [vmem:[#allocation10 + $0x110] sm:$0xff]
    %v769 = vld [vmem:[#allocation10 + $0x118] sm:$0xff]
    %v770 = vld [vmem:[#allocation10 + $0x120] sm:$0xff]
    %v771 = vld [vmem:[#allocation10 + $0x128] sm:$0xff]
    %v772 = vld [vmem:[#allocation10 + $0x130] sm:$0xff]
    %v773 = vld [vmem:[#allocation10 + $0x138] sm:$0xff]
    %v774 = vld [vmem:[#allocation10 + $0x140] sm:$0xff]
    %v775 = vld [vmem:[#allocation10 + $0x148] sm:$0xff]
    %v776 = vld [vmem:[#allocation10 + $0x150] sm:$0xff]
    %v777 = vld [vmem:[#allocation10 + $0x158] sm:$0xff]
    %v778 = vld [vmem:[#allocation10 + $0x160] sm:$0xff]
    %v779 = vld [vmem:[#allocation10 + $0x168] sm:$0xff]
    %v780 = vld [vmem:[#allocation10 + $0x170] sm:$0xff]
    %v781 = vld [vmem:[#allocation10 + $0x178] sm:$0xff]
    %v830 = vunpack.c.l.b16 %v734
    %v831 = vunpack.c.h.b16 %v734
    %v832 = vunpack.c.l.b16 %v735
    %v833 = vunpack.c.h.b16 %v735
    %v834 = vunpack.c.l.b16 %v736
    %v835 = vunpack.c.h.b16 %v736
    %v836 = vunpack.c.l.b16 %v737
    %v837 = vunpack.c.h.b16 %v737
    %v838 = vunpack.c.l.b16 %v738
    %v839 = vunpack.c.h.b16 %v738
    %v840 = vunpack.c.l.b16 %v739
    %v841 = vunpack.c.h.b16 %v739
    %v842 = vunpack.c.l.b16 %v740
    %v843 = vunpack.c.h.b16 %v740
    %v844 = vunpack.c.l.b16 %v741
    %v845 = vunpack.c.h.b16 %v741
    %v846 = vunpack.c.l.b16 %v742
    %v847 = vunpack.c.h.b16 %v742
    %v848 = vunpack.c.l.b16 %v743
    %v849 = vunpack.c.h.b16 %v743
    %v850 = vunpack.c.l.b16 %v744
    %v851 = vunpack.c.h.b16 %v744
    %v852 = vunpack.c.l.b16 %v745
    %v853 = vunpack.c.h.b16 %v745
    %v854 = vunpack.c.l.b16 %v746
    %v855 = vunpack.c.h.b16 %v746
    %v856 = vunpack.c.l.b16 %v747
    %v857 = vunpack.c.h.b16 %v747
    %v858 = vunpack.c.l.b16 %v748
    %v859 = vunpack.c.h.b16 %v748
    %v860 = vunpack.c.l.b16 %v749
    %v861 = vunpack.c.h.b16 %v749
    %v862 = vunpack.c.l.b16 %v750
    %v863 = vunpack.c.h.b16 %v750
    %v864 = vunpack.c.l.b16 %v751
    %v865 = vunpack.c.h.b16 %v751
    %v866 = vunpack.c.l.b16 %v752
    %v867 = vunpack.c.h.b16 %v752
    %v868 = vunpack.c.l.b16 %v753
    %v869 = vunpack.c.h.b16 %v753
    %v870 = vunpack.c.l.b16 %v754
    %v871 = vunpack.c.h.b16 %v754
    %v872 = vunpack.c.l.b16 %v755
    %v873 = vunpack.c.h.b16 %v755
    %v874 = vunpack.c.l.b16 %v756
    %v875 = vunpack.c.h.b16 %v756
    %v876 = vunpack.c.l.b16 %v757
    %v877 = vunpack.c.h.b16 %v757
    %v878 = vunpack.c.l.b16 %v758
    %v879 = vunpack.c.h.b16 %v758
    %v880 = vunpack.c.l.b16 %v759
    %v881 = vunpack.c.h.b16 %v759
    %v882 = vunpack.c.l.b16 %v760
    %v883 = vunpack.c.h.b16 %v760
    %v884 = vunpack.c.l.b16 %v761
    %v885 = vunpack.c.h.b16 %v761
    %v886 = vunpack.c.l.b16 %v762
    %v887 = vunpack.c.h.b16 %v762
    %v888 = vunpack.c.l.b16 %v763
    %v889 = vunpack.c.h.b16 %v763
    %v890 = vunpack.c.l.b16 %v764
    %v891 = vunpack.c.h.b16 %v764
    %v892 = vunpack.c.l.b16 %v765
    %v893 = vunpack.c.h.b16 %v765
    %v894 = vunpack.c.l.b16 %v766
    %v895 = vunpack.c.h.b16 %v766
    %v896 = vunpack.c.l.b16 %v767
    %v897 = vunpack.c.h.b16 %v767
    %v898 = vunpack.c.l.b16 %v768
    %v899 = vunpack.c.h.b16 %v768
    %v900 = vunpack.c.l.b16 %v769
    %v901 = vunpack.c.h.b16 %v769
    %v902 = vunpack.c.l.b16 %v770
    %v903 = vunpack.c.h.b16 %v770
    %v904 = vunpack.c.l.b16 %v771
    %v905 = vunpack.c.h.b16 %v771
    %v906 = vunpack.c.l.b16 %v772
    %v907 = vunpack.c.h.b16 %v772
    %v908 = vunpack.c.l.b16 %v773
    %v909 = vunpack.c.h.b16 %v773
    %v910 = vunpack.c.l.b16 %v774
    %v911 = vunpack.c.h.b16 %v774
    %v912 = vunpack.c.l.b16 %v775
    %v913 = vunpack.c.h.b16 %v775
    %v914 = vunpack.c.l.b16 %v776
    %v915 = vunpack.c.h.b16 %v776
    %v916 = vunpack.c.l.b16 %v777
    %v917 = vunpack.c.h.b16 %v777
    %v918 = vunpack.c.l.b16 %v778
    %v919 = vunpack.c.h.b16 %v778
    %v920 = vunpack.c.l.b16 %v779
    %v921 = vunpack.c.h.b16 %v779
    %v922 = vunpack.c.l.b16 %v780
    %v923 = vunpack.c.h.b16 %v780
    %v924 = vunpack.c.l.b16 %v781
    %v925 = vunpack.c.h.b16 %v781
    %v926 = vpack.c.b16 %v836, %v830
    %v927 = vpack.c.b16 %v837, %v831
    %v928 = vpack.c.b16 %v838, %v832
    %v929 = vpack.c.b16 %v839, %v833
    %v930 = vpack.c.b16 %v840, %v834
    %v931 = vpack.c.b16 %v841, %v835
    %v932 = vpack.c.b16 %v848, %v842
    %v933 = vpack.c.b16 %v849, %v843
    %v934 = vpack.c.b16 %v850, %v844
    %v935 = vpack.c.b16 %v851, %v845
    %v936 = vpack.c.b16 %v852, %v846
    %v937 = vpack.c.b16 %v853, %v847
    %v938 = vpack.c.b16 %v860, %v854
    %v939 = vpack.c.b16 %v861, %v855
    %v940 = vpack.c.b16 %v862, %v856
    %v941 = vpack.c.b16 %v863, %v857
    %v942 = vpack.c.b16 %v864, %v858
    %v943 = vpack.c.b16 %v865, %v859
    %v944 = vpack.c.b16 %v872, %v866
    %v945 = vpack.c.b16 %v873, %v867
    %v946 = vpack.c.b16 %v874, %v868
    %v947 = vpack.c.b16 %v875, %v869
    %v948 = vpack.c.b16 %v876, %v870
    %v949 = vpack.c.b16 %v877, %v871
    %v950 = vpack.c.b16 %v884, %v878
    %v951 = vpack.c.b16 %v885, %v879
    %v952 = vpack.c.b16 %v886, %v880
    %v953 = vpack.c.b16 %v887, %v881
    %v954 = vpack.c.b16 %v888, %v882
    %v955 = vpack.c.b16 %v889, %v883
    %v956 = vpack.c.b16 %v896, %v890
    %v957 = vpack.c.b16 %v897, %v891
    %v958 = vpack.c.b16 %v898, %v892
    %v959 = vpack.c.b16 %v899, %v893
    %v960 = vpack.c.b16 %v900, %v894
    %v961 = vpack.c.b16 %v901, %v895
    %v962 = vpack.c.b16 %v908, %v902
    %v963 = vpack.c.b16 %v909, %v903
    %v964 = vpack.c.b16 %v910, %v904
    %v965 = vpack.c.b16 %v911, %v905
    %v966 = vpack.c.b16 %v912, %v906
    %v967 = vpack.c.b16 %v913, %v907
    %v968 = vpack.c.b16 %v920, %v914
    %v969 = vpack.c.b16 %v921, %v915
    %v970 = vpack.c.b16 %v922, %v916
    %v971 = vpack.c.b16 %v923, %v917
    %v972 = vpack.c.b16 %v924, %v918
    %v973 = vpack.c.b16 %v925, %v919
    %1022 = vmatprep.subr.bf16.mxu0 %v927
    %1023 = vmatpush1.bf16.msra.mxu0 %v926
    %1024 = vmatprep.subr.bf16.mxu0 %v933
    %1025 = vmatpush1.bf16.msra.mxu0 %v932
    %1026 = vmatprep.subr.bf16.mxu0 %v939
    %1027 = vmatpush1.bf16.msra.mxu0 %v938
    %1028 = vmatprep.subr.bf16.mxu0 %v945
    %1029 = vmatpush1.bf16.msra.mxu0 %v944
    %1030 = vmatprep.subr.bf16.mxu0 %v951
    %1031 = vmatpush1.bf16.msra.mxu0 %v950
    %1032 = vmatprep.subr.bf16.mxu0 %v957
    %1033 = vmatpush1.bf16.msra.mxu0 %v956
    %1034 = vmatprep.subr.bf16.mxu0 %v963
    %1035 = vmatpush1.bf16.msra.mxu0 %v962
    %1036 = vmatprep.subr.bf16.mxu0 %v969
    %1037 = vmatpush1.bf16.msra.mxu0 %v968
    %1038 = vmatprep.subr.bf16.mxu0 0
    %1039 = vmatpush1.bf16.msra.mxu0 0
    %1040 = vmatprep.subr.bf16.mxu0 0
    %1041 = vmatpush1.bf16.msra.mxu0 0
    %1042 = vmatprep.subr.bf16.mxu0 0
    %1043 = vmatpush1.bf16.msra.mxu0 0
    %1044 = vmatprep.subr.bf16.mxu0 0
    %1045 = vmatpush1.bf16.msra.mxu0 0
    %1046 = vmatprep.subr.bf16.mxu0 0
    %1047 = vmatpush1.bf16.msra.mxu0 0
    %1048 = vmatprep.subr.bf16.mxu0 0
    %1049 = vmatpush1.bf16.msra.mxu0 0
    %1050 = vmatprep.subr.bf16.mxu0 0
    %1051 = vmatpush1.bf16.msra.mxu0 0
    %1052 = vmatprep.subr.bf16.mxu0 0
    %1053 = vmatpush1.bf16.msra.mxu0 0
    %1054 = vmatprep.mubr.bf16.mxu0 0
    %1055 = vmatmul.mubr.bf16.gmra.mrb[0].mxu0 %v733
    %v1056 = vpop.f32.mrb[0].mxu0
    %v1057 = vadd.f32 0.0, %v1056
    %v1058 = vpop.f32.mrb[0].mxu0
    %v1059 = vadd.f32 0.0, %v1058
    %v1060 = vpop.f32.mrb[0].mxu0
    %v1061 = vpop.f32.mrb[0].mxu0
    %1062 = vdwg.mxu0
    %1063 = vmatprep.subr.bf16.mxu0 %v929
    %1064 = vmatpush1.bf16.msra.mxu0 %v928
    %1065 = vmatprep.subr.bf16.mxu0 %v935
    %1066 = vmatpush1.bf16.msra.mxu0 %v934
    %1067 = vmatprep.subr.bf16.mxu0 %v941
    %1068 = vmatpush1.bf16.msra.mxu0 %v940
    %1069 = vmatprep.subr.bf16.mxu0 %v947
    %1070 = vmatpush1.bf16.msra.mxu0 %v946
    %1071 = vmatprep.subr.bf16.mxu0 %v953
    %1072 = vmatpush1.bf16.msra.mxu0 %v952
    %1073 = vmatprep.subr.bf16.mxu0 %v959
    %1074 = vmatpush1.bf16.msra.mxu0 %v958
    %1075 = vmatprep.subr.bf16.mxu0 %v965
    %1076 = vmatpush1.bf16.msra.mxu0 %v964
    %1077 = vmatprep.subr.bf16.mxu0 %v971
    %1078 = vmatpush1.bf16.msra.mxu0 %v970
    %1079 = vmatprep.subr.bf16.mxu0 0
    %1080 = vmatpush1.bf16.msra.mxu0 0
    %1081 = vmatprep.subr.bf16.mxu0 0
    %1082 = vmatpush1.bf16.msra.mxu0 0
    %1083 = vmatprep.subr.bf16.mxu0 0
    %1084 = vmatpush1.bf16.msra.mxu0 0
    %1085 = vmatprep.subr.bf16.mxu0 0
    %1086 = vmatpush1.bf16.msra.mxu0 0
    %1087 = vmatprep.subr.bf16.mxu0 0
    %1088 = vmatpush1.bf16.msra.mxu0 0
    %1089 = vmatprep.subr.bf16.mxu0 0
    %1090 = vmatpush1.bf16.msra.mxu0 0
    %1091 = vmatprep.subr.bf16.mxu0 0
    %1092 = vmatpush1.bf16.msra.mxu0 0
    %1093 = vmatprep.subr.bf16.mxu0 0
    %1094 = vmatpush1.bf16.msra.mxu0 0
    %1095 = vmatprep.mubr.bf16.mxu0 0
    %1096 = vmatmul.mubr.bf16.gmra.mrb[0].mxu0 %v733
    %v1097 = vpop.f32.mrb[0].mxu0
    %v1098 = vadd.f32 0.0, %v1097
    %v1099 = vpop.f32.mrb[0].mxu0
    %v1100 = vadd.f32 0.0, %v1099
    %v1101 = vpop.f32.mrb[0].mxu0
    %v1102 = vpop.f32.mrb[0].mxu0
    %1103 = vdwg.mxu0
    %1104 = vmatprep.subr.bf16.mxu0 %v931
    %1105 = vmatpush1.bf16.msra.mxu0 %v930
    %1106 = vmatprep.subr.bf16.mxu0 %v937
    %1107 = vmatpush1.bf16.msra.mxu0 %v936
    %1108 = vmatprep.subr.bf16.mxu0 %v943
    %1109 = vmatpush1.bf16.msra.mxu0 %v942
    %1110 = vmatprep.subr.bf16.mxu0 %v949
    %1111 = vmatpush1.bf16.msra.mxu0 %v948
    %1112 = vmatprep.subr.bf16.mxu0 %v955
    %1113 = vmatpush1.bf16.msra.mxu0 %v954
    %1114 = vmatprep.subr.bf16.mxu0 %v961
    %1115 = vmatpush1.bf16.msra.mxu0 %v960
    %1116 = vmatprep.subr.bf16.mxu0 %v967
    %1117 = vmatpush1.bf16.msra.mxu0 %v966
    %1118 = vmatprep.subr.bf16.mxu0 %v973
    %1119 = vmatpush1.bf16.msra.mxu0 %v972
    %1120 = vmatprep.subr.bf16.mxu0 0
    %1121 = vmatpush1.bf16.msra.mxu0 0
    %1122 = vmatprep.subr.bf16.mxu0 0
    %1123 = vmatpush1.bf16.msra.mxu0 0
    %1124 = vmatprep.subr.bf16.mxu0 0
    %1125 = vmatpush1.bf16.msra.mxu0 0
    %1126 = vmatprep.subr.bf16.mxu0 0
    %1127 = vmatpush1.bf16.msra.mxu0 0
    %1128 = vmatprep.subr.bf16.mxu0 0
    %1129 = vmatpush1.bf16.msra.mxu0 0
    %1130 = vmatprep.subr.bf16.mxu0 0
    %1131 = vmatpush1.bf16.msra.mxu0 0
    %1132 = vmatprep.subr.bf16.mxu0 0
    %1133 = vmatpush1.bf16.msra.mxu0 0
    %1134 = vmatprep.subr.bf16.mxu0 0
    %1135 = vmatpush1.bf16.msra.mxu0 0
    %1136 = vmatprep.mubr.bf16.mxu0 0
    %1137 = vmatmul.mubr.bf16.gmra.mrb[0].mxu0 %v733
    %v1138 = vpop.f32.mrb[0].mxu0
    %v1139 = vadd.f32 0.0, %v1138
    %v1140 = vpop.f32.mrb[0].mxu0
    %v1141 = vadd.f32 0.0, %v1140
    %v1142 = vpop.f32.mrb[0].mxu0
    %v1143 = vpop.f32.mrb[0].mxu0
    %1144 = vdwg.mxu0
    %v1193 = vunpack.c.l.b16 %v685
    %v1194 = vunpack.c.h.b16 %v685
    %v1195 = vunpack.c.l.b16 %v686
    %v1196 = vunpack.c.h.b16 %v686
    %v1197 = vunpack.c.l.b16 %v687
    %v1198 = vunpack.c.h.b16 %v687
    %v1199 = vunpack.c.l.b16 %v688
    %v1200 = vunpack.c.h.b16 %v688
    %v1201 = vunpack.c.l.b16 %v689
    %v1202 = vunpack.c.h.b16 %v689
    %v1203 = vunpack.c.l.b16 %v690
    %v1204 = vunpack.c.h.b16 %v690
    %v1205 = vunpack.c.l.b16 %v691
    %v1206 = vunpack.c.h.b16 %v691
    %v1207 = vunpack.c.l.b16 %v692
    %v1208 = vunpack.c.h.b16 %v692
    %v1209 = vunpack.c.l.b16 %v693
    %v1210 = vunpack.c.h.b16 %v693
    %v1211 = vunpack.c.l.b16 %v694
    %v1212 = vunpack.c.h.b16 %v694
    %v1213 = vunpack.c.l.b16 %v695
    %v1214 = vunpack.c.h.b16 %v695
    %v1215 = vunpack.c.l.b16 %v696
    %v1216 = vunpack.c.h.b16 %v696
    %v1217 = vunpack.c.l.b16 %v697
    %v1218 = vunpack.c.h.b16 %v697
    %v1219 = vunpack.c.l.b16 %v698
    %v1220 = vunpack.c.h.b16 %v698
    %v1221 = vunpack.c.l.b16 %v699
    %v1222 = vunpack.c.h.b16 %v699
    %v1223 = vunpack.c.l.b16 %v700
    %v1224 = vunpack.c.h.b16 %v700
    %v1225 = vunpack.c.l.b16 %v701
    %v1226 = vunpack.c.h.b16 %v701
    %v1227 = vunpack.c.l.b16 %v702
    %v1228 = vunpack.c.h.b16 %v702
    %v1229 = vunpack.c.l.b16 %v703
    %v1230 = vunpack.c.h.b16 %v703
    %v1231 = vunpack.c.l.b16 %v704
    %v1232 = vunpack.c.h.b16 %v704
    %v1233 = vunpack.c.l.b16 %v705
    %v1234 = vunpack.c.h.b16 %v705
    %v1235 = vunpack.c.l.b16 %v706
    %v1236 = vunpack.c.h.b16 %v706
    %v1237 = vunpack.c.l.b16 %v707
    %v1238 = vunpack.c.h.b16 %v707
    %v1239 = vunpack.c.l.b16 %v708
    %v1240 = vunpack.c.h.b16 %v708
    %v1241 = vunpack.c.l.b16 %v709
    %v1242 = vunpack.c.h.b16 %v709
    %v1243 = vunpack.c.l.b16 %v710
    %v1244 = vunpack.c.h.b16 %v710
    %v1245 = vunpack.c.l.b16 %v711
    %v1246 = vunpack.c.h.b16 %v711
    %v1247 = vunpack.c.l.b16 %v712
    %v1248 = vunpack.c.h.b16 %v712
    %v1249 = vunpack.c.l.b16 %v713
    %v1250 = vunpack.c.h.b16 %v713
    %v1251 = vunpack.c.l.b16 %v714
    %v1252 = vunpack.c.h.b16 %v714
    %v1253 = vunpack.c.l.b16 %v715
    %v1254 = vunpack.c.h.b16 %v715
    %v1255 = vunpack.c.l.b16 %v716
    %v1256 = vunpack.c.h.b16 %v716
    %v1257 = vunpack.c.l.b16 %v717
    %v1258 = vunpack.c.h.b16 %v717
    %v1259 = vunpack.c.l.b16 %v718
    %v1260 = vunpack.c.h.b16 %v718
    %v1261 = vunpack.c.l.b16 %v719
    %v1262 = vunpack.c.h.b16 %v719
    %v1263 = vunpack.c.l.b16 %v720
    %v1264 = vunpack.c.h.b16 %v720
    %v1265 = vunpack.c.l.b16 %v721
    %v1266 = vunpack.c.h.b16 %v721
    %v1267 = vunpack.c.l.b16 %v722
    %v1268 = vunpack.c.h.b16 %v722
    %v1269 = vunpack.c.l.b16 %v723
    %v1270 = vunpack.c.h.b16 %v723
    %v1271 = vunpack.c.l.b16 %v724
    %v1272 = vunpack.c.h.b16 %v724
    %v1273 = vunpack.c.l.b16 %v725
    %v1274 = vunpack.c.h.b16 %v725
    %v1275 = vunpack.c.l.b16 %v726
    %v1276 = vunpack.c.h.b16 %v726
    %v1277 = vunpack.c.l.b16 %v727
    %v1278 = vunpack.c.h.b16 %v727
    %v1279 = vunpack.c.l.b16 %v728
    %v1280 = vunpack.c.h.b16 %v728
    %v1281 = vunpack.c.l.b16 %v729
    %v1282 = vunpack.c.h.b16 %v729
    %v1283 = vunpack.c.l.b16 %v730
    %v1284 = vunpack.c.h.b16 %v730
    %v1285 = vunpack.c.l.b16 %v731
    %v1286 = vunpack.c.h.b16 %v731
    %v1287 = vunpack.c.l.b16 %v732
    %v1288 = vunpack.c.h.b16 %v732
    %v1289 = vpack.c.b16 %v1199, %v1193
    %v1290 = vpack.c.b16 %v1200, %v1194
    %v1291 = vpack.c.b16 %v1201, %v1195
    %v1292 = vpack.c.b16 %v1202, %v1196
    %v1293 = vpack.c.b16 %v1203, %v1197
    %v1294 = vpack.c.b16 %v1204, %v1198
    %v1295 = vpack.c.b16 %v1211, %v1205
    %v1296 = vpack.c.b16 %v1212, %v1206
    %v1297 = vpack.c.b16 %v1213, %v1207
    %v1298 = vpack.c.b16 %v1214, %v1208
    %v1299 = vpack.c.b16 %v1215, %v1209
    %v1300 = vpack.c.b16 %v1216, %v1210
    %v1301 = vpack.c.b16 %v1223, %v1217
    %v1302 = vpack.c.b16 %v1224, %v1218
    %v1303 = vpack.c.b16 %v1225, %v1219
    %v1304 = vpack.c.b16 %v1226, %v1220
    %v1305 = vpack.c.b16 %v1227, %v1221
    %v1306 = vpack.c.b16 %v1228, %v1222
    %v1307 = vpack.c.b16 %v1235, %v1229
    %v1308 = vpack.c.b16 %v1236, %v1230
    %v1309 = vpack.c.b16 %v1237, %v1231
    %v1310 = vpack.c.b16 %v1238, %v1232
    %v1311 = vpack.c.b16 %v1239, %v1233
    %v1312 = vpack.c.b16 %v1240, %v1234
    %v1313 = vpack.c.b16 %v1247, %v1241
    %v1314 = vpack.c.b16 %v1248, %v1242
    %v1315 = vpack.c.b16 %v1249, %v1243
    %v1316 = vpack.c.b16 %v1250, %v1244
    %v1317 = vpack.c.b16 %v1251, %v1245
    %v1318 = vpack.c.b16 %v1252, %v1246
    %v1319 = vpack.c.b16 %v1259, %v1253
    %v1320 = vpack.c.b16 %v1260, %v1254
    %v1321 = vpack.c.b16 %v1261, %v1255
    %v1322 = vpack.c.b16 %v1262, %v1256
    %v1323 = vpack.c.b16 %v1263, %v1257
    %v1324 = vpack.c.b16 %v1264, %v1258
    %v1325 = vpack.c.b16 %v1271, %v1265
    %v1326 = vpack.c.b16 %v1272, %v1266
    %v1327 = vpack.c.b16 %v1273, %v1267
    %v1328 = vpack.c.b16 %v1274, %v1268
    %v1329 = vpack.c.b16 %v1275, %v1269
    %v1330 = vpack.c.b16 %v1276, %v1270
    %v1331 = vpack.c.b16 %v1283, %v1277
    %v1332 = vpack.c.b16 %v1284, %v1278
    %v1333 = vpack.c.b16 %v1285, %v1279
    %v1334 = vpack.c.b16 %v1286, %v1280
    %v1335 = vpack.c.b16 %v1287, %v1281
    %v1336 = vpack.c.b16 %v1288, %v1282
    %1385 = vmatprep.subr.bf16.mxu0 %v1290
    %1386 = vmatpush1.bf16.msra.mxu0 %v1289
    %1387 = vmatprep.subr.bf16.mxu0 %v1296
    %1388 = vmatpush1.bf16.msra.mxu0 %v1295
    %1389 = vmatprep.subr.bf16.mxu0 %v1302
    %1390 = vmatpush1.bf16.msra.mxu0 %v1301
    %1391 = vmatprep.subr.bf16.mxu0 %v1308
    %1392 = vmatpush1.bf16.msra.mxu0 %v1307
    %1393 = vmatprep.subr.bf16.mxu0 %v1314
    %1394 = vmatpush1.bf16.msra.mxu0 %v1313
    %1395 = vmatprep.subr.bf16.mxu0 %v1320
    %1396 = vmatpush1.bf16.msra.mxu0 %v1319
    %1397 = vmatprep.subr.bf16.mxu0 %v1326
    %1398 = vmatpush1.bf16.msra.mxu0 %v1325
    %1399 = vmatprep.subr.bf16.mxu0 %v1332
    %1400 = vmatpush1.bf16.msra.mxu0 %v1331
    %1401 = vmatprep.subr.bf16.mxu0 0
    %1402 = vmatpush1.bf16.msra.mxu0 0
    %1403 = vmatprep.subr.bf16.mxu0 0
    %1404 = vmatpush1.bf16.msra.mxu0 0
    %1405 = vmatprep.subr.bf16.mxu0 0
    %1406 = vmatpush1.bf16.msra.mxu0 0
    %1407 = vmatprep.subr.bf16.mxu0 0
    %1408 = vmatpush1.bf16.msra.mxu0 0
    %1409 = vmatprep.subr.bf16.mxu0 0
    %1410 = vmatpush1.bf16.msra.mxu0 0
    %1411 = vmatprep.subr.bf16.mxu0 0
    %1412 = vmatpush1.bf16.msra.mxu0 0
    %1413 = vmatprep.subr.bf16.mxu0 0
    %1414 = vmatpush1.bf16.msra.mxu0 0
    %1415 = vmatprep.subr.bf16.mxu0 0
    %1416 = vmatpush1.bf16.msra.mxu0 0
    %1417 = vmatprep.mubr.bf16.mxu0 0
    %1418 = vmatmul.mubr.bf16.gmra.mrb[0].mxu0 %v684
    %v1419 = vpop.f32.mrb[0].mxu0
    %v1420 = vadd.f32 %v1057, %v1419
    %v1421 = vpop.f32.mrb[0].mxu0
    %v1422 = vadd.f32 %v1059, %v1421
    %v1423 = vpop.f32.mrb[0].mxu0
    %v1424 = vpop.f32.mrb[0].mxu0
    %1425 = vdwg.mxu0
    %1426 = vmatprep.subr.bf16.mxu0 %v1292
    %1427 = vmatpush1.bf16.msra.mxu0 %v1291
    %1428 = vmatprep.subr.bf16.mxu0 %v1298
    %1429 = vmatpush1.bf16.msra.mxu0 %v1297
    %1430 = vmatprep.subr.bf16.mxu0 %v1304
    %1431 = vmatpush1.bf16.msra.mxu0 %v1303
    %1432 = vmatprep.subr.bf16.mxu0 %v1310
    %1433 = vmatpush1.bf16.msra.mxu0 %v1309
    %1434 = vmatprep.subr.bf16.mxu0 %v1316
    %1435 = vmatpush1.bf16.msra.mxu0 %v1315
    %1436 = vmatprep.subr.bf16.mxu0 %v1322
    %1437 = vmatpush1.bf16.msra.mxu0 %v1321
    %1438 = vmatprep.subr.bf16.mxu0 %v1328
    %1439 = vmatpush1.bf16.msra.mxu0 %v1327
    %1440 = vmatprep.subr.bf16.mxu0 %v1334
    %1441 = vmatpush1.bf16.msra.mxu0 %v1333
    %1442 = vmatprep.subr.bf16.mxu0 0
    %1443 = vmatpush1.bf16.msra.mxu0 0
    %1444 = vmatprep.subr.bf16.mxu0 0
    %1445 = vmatpush1.bf16.msra.mxu0 0
    %1446 = vmatprep.subr.bf16.mxu0 0
    %1447 = vmatpush1.bf16.msra.mxu0 0
    %1448 = vmatprep.subr.bf16.mxu0 0
    %1449 = vmatpush1.bf16.msra.mxu0 0
    %1450 = vmatprep.subr.bf16.mxu0 0
    %1451 = vmatpush1.bf16.msra.mxu0 0
    %1452 = vmatprep.subr.bf16.mxu0 0
    %1453 = vmatpush1.bf16.msra.mxu0 0
    %1454 = vmatprep.subr.bf16.mxu0 0
    %1455 = vmatpush1.bf16.msra.mxu0 0
    %1456 = vmatprep.subr.bf16.mxu0 0
    %1457 = vmatpush1.bf16.msra.mxu0 0
    %1458 = vmatprep.mubr.bf16.mxu0 0
    %1459 = vmatmul.mubr.bf16.gmra.mrb[0].mxu0 %v684
    %v1460 = vpop.f32.mrb[0].mxu0
    %v1461 = vadd.f32 %v1098, %v1460
    %v1462 = vpop.f32.mrb[0].mxu0
    %v1463 = vadd.f32 %v1100, %v1462
    %v1464 = vpop.f32.mrb[0].mxu0
    %v1465 = vpop.f32.mrb[0].mxu0
    %1466 = vdwg.mxu0
    %1467 = vmatprep.subr.bf16.mxu0 %v1294
    %1468 = vmatpush1.bf16.msra.mxu0 %v1293
    %1469 = vmatprep.subr.bf16.mxu0 %v1300
    %1470 = vmatpush1.bf16.msra.mxu0 %v1299
    %1471 = vmatprep.subr.bf16.mxu0 %v1306
    %1472 = vmatpush1.bf16.msra.mxu0 %v1305
    %1473 = vmatprep.subr.bf16.mxu0 %v1312
    %1474 = vmatpush1.bf16.msra.mxu0 %v1311
    %1475 = vmatprep.subr.bf16.mxu0 %v1318
    %1476 = vmatpush1.bf16.msra.mxu0 %v1317
    %1477 = vmatprep.subr.bf16.mxu0 %v1324
    %1478 = vmatpush1.bf16.msra.mxu0 %v1323
    %1479 = vmatprep.subr.bf16.mxu0 %v1330
    %1480 = vmatpush1.bf16.msra.mxu0 %v1329
    %1481 = vmatprep.subr.bf16.mxu0 %v1336
    %1482 = vmatpush1.bf16.msra.mxu0 %v1335
    %1483 = vmatprep.subr.bf16.mxu0 0
    %1484 = vmatpush1.bf16.msra.mxu0 0
    %1485 = vmatprep.subr.bf16.mxu0 0
    %1486 = vmatpush1.bf16.msra.mxu0 0
    %1487 = vmatprep.subr.bf16.mxu0 0
    %1488 = vmatpush1.bf16.msra.mxu0 0
    %1489 = vmatprep.subr.bf16.mxu0 0
    %1490 = vmatpush1.bf16.msra.mxu0 0
    %1491 = vmatprep.subr.bf16.mxu0 0
    %1492 = vmatpush1.bf16.msra.mxu0 0
    %1493 = vmatprep.subr.bf16.mxu0 0
    %1494 = vmatpush1.bf16.msra.mxu0 0
    %1495 = vmatprep.subr.bf16.mxu0 0
    %1496 = vmatpush1.bf16.msra.mxu0 0
    %1497 = vmatprep.subr.bf16.mxu0 0
    %1498 = vmatpush1.bf16.msra.mxu0 0
    %1499 = vmatprep.mubr.bf16.mxu0 0
    %1500 = vmatmul.mubr.bf16.gmra.mrb[0].mxu0 %v684
    %v1501 = vpop.f32.mrb[0].mxu0
    %v1502 = vadd.f32 %v1139, %v1501
    %v1503 = vpop.f32.mrb[0].mxu0
    %v1504 = vadd.f32 %v1141, %v1503
    %v1505 = vpop.f32.mrb[0].mxu0
    %v1506 = vpop.f32.mrb[0].mxu0
    %1507 = vdwg.mxu0
    %v1508 = vld [vmem:[%s11] sm:$0x3f]
    %v1510 = vlaneseq
    %v1511 = vshrl.u32 %v1510, 7
    %v1512 = vsub.s32 0, %v1511
    %v1513 = vrot.slane %v1508, %v1512
    %v1514 = vlaneseq
    %v1515 = vshrl.u32 %v1514, 7
    %v1516 = vsub.s32 1, %v1515
    %v1517 = vrot.slane %v1508, %v1516
    %v1518 = vlaneseq
    %v1519 = vshrl.u32 %v1518, 7
    %v1520 = vsub.s32 2, %v1519
    %v1521 = vrot.slane %v1508, %v1520
    %v1522 = vlaneseq
    %v1523 = vshrl.u32 %v1522, 7
    %v1524 = vsub.s32 3, %v1523
    %v1525 = vrot.slane %v1508, %v1524
    %v1526 = vlaneseq
    %v1527 = vshrl.u32 %v1526, 7
    %v1528 = vsub.s32 4, %v1527
    %v1529 = vrot.slane %v1508, %v1528
    %v1530 = vlaneseq
    %v1531 = vshrl.u32 %v1530, 7
    %v1532 = vsub.s32 5, %v1531
    %v1533 = vrot.slane %v1508, %v1532
    %v1540 = vadd.f32 %v1420, %v1513
    %v1541 = vadd.f32 %v1422, %v1517
    %v1542 = vadd.f32 %v1461, %v1521
    %v1543 = vadd.f32 %v1463, %v1525
    %v1544 = vadd.f32 %v1502, %v1529
    %v1545 = vadd.f32 %v1504, %v1533
    %v1546 = vxor.u32 %v1540, 2147483648
    %v1547 = vxor.u32 %v1541, 2147483648
    %v1548 = vmul.f32 %v1546, 1.442695
    %v1549 = vpow.pop %v1548
    %v1550 = vmul.f32 %v1547, 1.442695
    %v1551 = vpow.pop %v1550
    %v1552 = vadd.f32 %v1549, 1.0
    %v1553 = vadd.f32 %v1551, 1.0
    %v1554 = vrcp.pop %v1552
    %v1555 = vmul.f32 1.0, %v1554
    %v1556 = vrcp.pop %v1553
    %v1557 = vmul.f32 1.0, %v1556
    %v1558 = vtanh.pop %v1542
    %v1559 = vtanh.pop %v1543
    %v1560 = vxor.u32 %v1544, 2147483648
    %v1561 = vxor.u32 %v1545, 2147483648
    %v1562 = vmul.f32 %v1560, 1.442695
    %v1563 = vpow.pop %v1562
    %v1564 = vmul.f32 %v1561, 1.442695
    %v1565 = vpow.pop %v1564
    %v1566 = vadd.f32 %v1563, 1.0
    %v1567 = vadd.f32 %v1565, 1.0
    %v1568 = vrcp.pop %v1566
    %v1569 = vmul.f32 1.0, %v1568
    %v1570 = vrcp.pop %v1567
    %v1571 = vmul.f32 1.0, %v1570
    %v1572 = vmul.f32 %v1555, %v1558
    %v1573 = vmul.f32 %v1557, %v1559
    %v1574 = vtanh.pop %v1572
    %v1575 = vtanh.pop %v1573
    %v1576 = vmul.f32 %v1569, %v1574
    %v1577 = vmul.f32 %v1571, %v1575
    %v1578 = vpack.c.bf16 %v1576, %v1576
    %v1579 = vpack.c.bf16 %v1577, %v1577
    %v1580 = vld [vmem:[#allocation11] sm:$0xff]
    %v1581 = vld [vmem:[#allocation11 + $0x8] sm:$0xff]
    %v1582 = vld [vmem:[#allocation11 + $0x10] sm:$0xff]
    %v1583 = vld [vmem:[#allocation11 + $0x18] sm:$0xff]
    %v1584 = vld [vmem:[#allocation11 + $0x20] sm:$0xff]
    %v1585 = vld [vmem:[#allocation11 + $0x28] sm:$0xff]
    %v1586 = vld [vmem:[#allocation11 + $0x30] sm:$0xff]
    %v1587 = vld [vmem:[#allocation11 + $0x38] sm:$0xff]
    %v1588 = vld [vmem:[#allocation11 + $0x40] sm:$0xff]
    %v1589 = vld [vmem:[#allocation11 + $0x48] sm:$0xff]
    %v1590 = vld [vmem:[#allocation11 + $0x50] sm:$0xff]
    %v1591 = vld [vmem:[#allocation11 + $0x58] sm:$0xff]
    %v1592 = vld [vmem:[#allocation11 + $0x60] sm:$0xff]
    %v1593 = vld [vmem:[#allocation11 + $0x68] sm:$0xff]
    %v1594 = vld [vmem:[#allocation11 + $0x70] sm:$0xff]
    %v1595 = vld [vmem:[#allocation11 + $0x78] sm:$0xff]
    %v1596 = vld [vmem:[#allocation11 + $0x80] sm:$0xff]
    %v1597 = vld [vmem:[#allocation11 + $0x88] sm:$0xff]
    %v1598 = vld [vmem:[#allocation11 + $0x90] sm:$0xff]
    %v1599 = vld [vmem:[#allocation11 + $0x98] sm:$0xff]
    %v1600 = vld [vmem:[#allocation11 + $0xa0] sm:$0xff]
    %v1601 = vld [vmem:[#allocation11 + $0xa8] sm:$0xff]
    %v1602 = vld [vmem:[#allocation11 + $0xb0] sm:$0xff]
    %v1603 = vld [vmem:[#allocation11 + $0xb8] sm:$0xff]
    %v1604 = vld [vmem:[#allocation11 + $0xc0] sm:$0xff]
    %v1605 = vld [vmem:[#allocation11 + $0xc8] sm:$0xff]
    %v1606 = vld [vmem:[#allocation11 + $0xd0] sm:$0xff]
    %v1607 = vld [vmem:[#allocation11 + $0xd8] sm:$0xff]
    %v1608 = vld [vmem:[#allocation11 + $0xe0] sm:$0xff]
    %v1609 = vld [vmem:[#allocation11 + $0xe8] sm:$0xff]
    %v1610 = vld [vmem:[#allocation11 + $0xf0] sm:$0xff]
    %v1611 = vld [vmem:[#allocation11 + $0xf8] sm:$0xff]
    %v1612 = vld [vmem:[%s13] sm:$0x3]
    %v1614 = vlaneseq
    %v1615 = vshrl.u32 %v1614, 7
    %v1616 = vsub.s32 0, %v1615
    %v1617 = vrot.slane %v1612, %v1616
    %v1618 = vlaneseq
    %v1619 = vshrl.u32 %v1618, 7
    %v1620 = vsub.s32 1, %v1619
    %v1621 = vrot.slane %v1612, %v1620
    %v1656 = vunpack.c.l.b16 %v1580
    %v1657 = vunpack.c.h.b16 %v1580
    %v1658 = vunpack.c.l.b16 %v1581
    %v1659 = vunpack.c.h.b16 %v1581
    %v1660 = vunpack.c.l.b16 %v1582
    %v1661 = vunpack.c.h.b16 %v1582
    %v1662 = vunpack.c.l.b16 %v1583
    %v1663 = vunpack.c.h.b16 %v1583
    %v1664 = vunpack.c.l.b16 %v1584
    %v1665 = vunpack.c.h.b16 %v1584
    %v1666 = vunpack.c.l.b16 %v1585
    %v1667 = vunpack.c.h.b16 %v1585
    %v1668 = vunpack.c.l.b16 %v1586
    %v1669 = vunpack.c.h.b16 %v1586
    %v1670 = vunpack.c.l.b16 %v1587
    %v1671 = vunpack.c.h.b16 %v1587
    %v1672 = vunpack.c.l.b16 %v1588
    %v1673 = vunpack.c.h.b16 %v1588
    %v1674 = vunpack.c.l.b16 %v1589
    %v1675 = vunpack.c.h.b16 %v1589
    %v1676 = vunpack.c.l.b16 %v1590
    %v1677 = vunpack.c.h.b16 %v1590
    %v1678 = vunpack.c.l.b16 %v1591
    %v1679 = vunpack.c.h.b16 %v1591
    %v1680 = vunpack.c.l.b16 %v1592
    %v1681 = vunpack.c.h.b16 %v1592
    %v1682 = vunpack.c.l.b16 %v1593
    %v1683 = vunpack.c.h.b16 %v1593
    %v1684 = vunpack.c.l.b16 %v1594
    %v1685 = vunpack.c.h.b16 %v1594
    %v1686 = vunpack.c.l.b16 %v1595
    %v1687 = vunpack.c.h.b16 %v1595
    %v1688 = vunpack.c.l.b16 %v1596
    %v1689 = vunpack.c.h.b16 %v1596
    %v1690 = vunpack.c.l.b16 %v1597
    %v1691 = vunpack.c.h.b16 %v1597
    %v1692 = vunpack.c.l.b16 %v1598
    %v1693 = vunpack.c.h.b16 %v1598
    %v1694 = vunpack.c.l.b16 %v1599
    %v1695 = vunpack.c.h.b16 %v1599
    %v1696 = vunpack.c.l.b16 %v1600
    %v1697 = vunpack.c.h.b16 %v1600
    %v1698 = vunpack.c.l.b16 %v1601
    %v1699 = vunpack.c.h.b16 %v1601
    %v1700 = vunpack.c.l.b16 %v1602
    %v1701 = vunpack.c.h.b16 %v1602
    %v1702 = vunpack.c.l.b16 %v1603
    %v1703 = vunpack.c.h.b16 %v1603
    %v1704 = vunpack.c.l.b16 %v1604
    %v1705 = vunpack.c.h.b16 %v1604
    %v1706 = vunpack.c.l.b16 %v1605
    %v1707 = vunpack.c.h.b16 %v1605
    %v1708 = vunpack.c.l.b16 %v1606
    %v1709 = vunpack.c.h.b16 %v1606
    %v1710 = vunpack.c.l.b16 %v1607
    %v1711 = vunpack.c.h.b16 %v1607
    %v1712 = vunpack.c.l.b16 %v1608
    %v1713 = vunpack.c.h.b16 %v1608
    %v1714 = vunpack.c.l.b16 %v1609
    %v1715 = vunpack.c.h.b16 %v1609
    %v1716 = vunpack.c.l.b16 %v1610
    %v1717 = vunpack.c.h.b16 %v1610
    %v1718 = vunpack.c.l.b16 %v1611
    %v1719 = vunpack.c.h.b16 %v1611
    %v1720 = vpack.c.b16 %v1658, %v1656
    %v1721 = vpack.c.b16 %v1659, %v1657
    %v1722 = vpack.c.b16 %v1662, %v1660
    %v1723 = vpack.c.b16 %v1663, %v1661
    %v1724 = vpack.c.b16 %v1666, %v1664
    %v1725 = vpack.c.b16 %v1667, %v1665
    %v1726 = vpack.c.b16 %v1670, %v1668
    %v1727 = vpack.c.b16 %v1671, %v1669
    %v1728 = vpack.c.b16 %v1674, %v1672
    %v1729 = vpack.c.b16 %v1675, %v1673
    %v1730 = vpack.c.b16 %v1678, %v1676
    %v1731 = vpack.c.b16 %v1679, %v1677
    %v1732 = vpack.c.b16 %v1682, %v1680
    %v1733 = vpack.c.b16 %v1683, %v1681
    %v1734 = vpack.c.b16 %v1686, %v1684
    %v1735 = vpack.c.b16 %v1687, %v1685
    %v1736 = vpack.c.b16 %v1690, %v1688
    %v1737 = vpack.c.b16 %v1691, %v1689
    %v1738 = vpack.c.b16 %v1694, %v1692
    %v1739 = vpack.c.b16 %v1695, %v1693
    %v1740 = vpack.c.b16 %v1698, %v1696
    %v1741 = vpack.c.b16 %v1699, %v1697
    %v1742 = vpack.c.b16 %v1702, %v1700
    %v1743 = vpack.c.b16 %v1703, %v1701
    %v1744 = vpack.c.b16 %v1706, %v1704
    %v1745 = vpack.c.b16 %v1707, %v1705
    %v1746 = vpack.c.b16 %v1710, %v1708
    %v1747 = vpack.c.b16 %v1711, %v1709
    %v1748 = vpack.c.b16 %v1714, %v1712
    %v1749 = vpack.c.b16 %v1715, %v1713
    %v1750 = vpack.c.b16 %v1718, %v1716
    %v1751 = vpack.c.b16 %v1719, %v1717
    %1784 = vmatprep.subr.bf16.mxu0 %v1721
    %1785 = vmatpush1.bf16.msra.mxu0 %v1720
    %1786 = vmatprep.subr.bf16.mxu0 %v1723
    %1787 = vmatpush1.bf16.msra.mxu0 %v1722
    %1788 = vmatprep.subr.bf16.mxu0 %v1725
    %1789 = vmatpush1.bf16.msra.mxu0 %v1724
    %1790 = vmatprep.subr.bf16.mxu0 %v1727
    %1791 = vmatpush1.bf16.msra.mxu0 %v1726
    %1792 = vmatprep.subr.bf16.mxu0 %v1729
    %1793 = vmatpush1.bf16.msra.mxu0 %v1728
    %1794 = vmatprep.subr.bf16.mxu0 %v1731
    %1795 = vmatpush1.bf16.msra.mxu0 %v1730
    %1796 = vmatprep.subr.bf16.mxu0 %v1733
    %1797 = vmatpush1.bf16.msra.mxu0 %v1732
    %1798 = vmatprep.subr.bf16.mxu0 %v1735
    %1799 = vmatpush1.bf16.msra.mxu0 %v1734
    %1800 = vmatprep.subr.bf16.mxu0 %v1737
    %1801 = vmatpush1.bf16.msra.mxu0 %v1736
    %1802 = vmatprep.subr.bf16.mxu0 %v1739
    %1803 = vmatpush1.bf16.msra.mxu0 %v1738
    %1804 = vmatprep.subr.bf16.mxu0 %v1741
    %1805 = vmatpush1.bf16.msra.mxu0 %v1740
    %1806 = vmatprep.subr.bf16.mxu0 %v1743
    %1807 = vmatpush1.bf16.msra.mxu0 %v1742
    %1808 = vmatprep.subr.bf16.mxu0 %v1745
    %1809 = vmatpush1.bf16.msra.mxu0 %v1744
    %1810 = vmatprep.subr.bf16.mxu0 %v1747
    %1811 = vmatpush1.bf16.msra.mxu0 %v1746
    %1812 = vmatprep.subr.bf16.mxu0 %v1749
    %1813 = vmatpush1.bf16.msra.mxu0 %v1748
    %1814 = vmatprep.subr.bf16.mxu0 %v1751
    %1815 = vmatpush1.bf16.msra.mxu0 %v1750
    %1816 = vmatprep.mubr.bf16.mxu0 %v1579
    %1817 = vmatmul.mubr.bf16.gmra.mrb[0].mxu0 %v1578
    %v1818 = vpop.f32.mrb[0].mxu0
    %v1819 = vadd.f32 %v1617, %v1818
    %v1820 = vpop.f32.mrb[0].mxu0
    %v1821 = vadd.f32 %v1621, %v1820
    %v1822 = vpop.f32.mrb[0].mxu0
    %v1823 = vpop.f32.mrb[0].mxu0
    %1824 = vdwg.mxu0
    %v1825 = vxor.u32 %v1819, 2147483648
    %v1826 = vxor.u32 %v1821, 2147483648
    %v1827 = vmul.f32 %v1825, 1.442695
    %v1828 = vpow.pop %v1827
    %v1829 = vmul.f32 %v1826, 1.442695
    %v1830 = vpow.pop %v1829
    %v1831 = vadd.f32 %v1828, 1.0
    %v1832 = vadd.f32 %v1830, 1.0
    %v1833 = vrcp.pop %v1831
    %v1834 = vmul.f32 1.0, %v1833
    %v1835 = vrcp.pop %v1832
    %v1836 = vmul.f32 1.0, %v1835
    %v1837 = vmul.f32 %v1819, %v1834
    %v1838 = vmul.f32 %v1821, %v1836
    %v1839 = vadd.f32 %v1837, %v1838
    %1840 = vadd.xlane.f32.xlu0 %v1839
    %v1841 = vpop.xlane.xlu0 %1840
    %v1842 = vrcp.pop 256.0
    %v1843 = vmul.f32 %v1841, %v1842
    %v1844 = vmul.f32 %v1837, %v1837
    %v1845 = vmul.f32 %v1838, %v1838
    %v1846 = vadd.f32 %v1844, %v1845
    %1847 = vadd.xlane.f32.xlu0 %v1846
    %v1848 = vpop.xlane.xlu0 %1847
    %v1849 = vmul.f32 %v1848, %v1842
    %v1850 = vmul.f32 %v1843, %v1843
    %v1851 = vsub.f32 %v1849, %v1850
    %v1852 = vmax.f32 %v1851, 0.0
    %v1853 = vsub.f32 %v1837, %v1843
    %v1854 = vsub.f32 %v1838, %v1843
    %v1855 = vadd.f32 %v1852, 1e-05
    %v1856 = vrsqrt.pop %v1855
    %v1857 = vmul.f32 %v1853, %v1856
    %v1858 = vmul.f32 %v1854, %v1856
    %v1859 = vpack.c.bf16 %v1857, %v1857
    %v1860 = vpack.c.bf16 %v1858, %v1858
    %v1861 = vld [vmem:[#allocation13] sm:$0xff]
    %v1862 = vld [vmem:[#allocation13 + $0x8] sm:$0xff]
    %v1863 = vld [vmem:[#allocation13 + $0x10] sm:$0xff]
    %v1864 = vld [vmem:[#allocation13 + $0x18] sm:$0xff]
    %v1865 = vld [vmem:[#allocation13 + $0x20] sm:$0xff]
    %v1866 = vld [vmem:[#allocation13 + $0x28] sm:$0xff]
    %v1867 = vld [vmem:[#allocation13 + $0x30] sm:$0xff]
    %v1868 = vld [vmem:[#allocation13 + $0x38] sm:$0xff]
    %v1869 = vld [vmem:[#allocation13 + $0x40] sm:$0xff]
    %v1870 = vld [vmem:[#allocation13 + $0x48] sm:$0xff]
    %v1871 = vld [vmem:[#allocation13 + $0x50] sm:$0xff]
    %v1872 = vld [vmem:[#allocation13 + $0x58] sm:$0xff]
    %v1873 = vld [vmem:[#allocation13 + $0x60] sm:$0xff]
    %v1874 = vld [vmem:[#allocation13 + $0x68] sm:$0xff]
    %v1875 = vld [vmem:[#allocation13 + $0x70] sm:$0xff]
    %v1876 = vld [vmem:[#allocation13 + $0x78] sm:$0xff]
    %v1877 = vld [vmem:[#allocation13 + $0x80] sm:$0xff]
    %v1878 = vld [vmem:[#allocation13 + $0x88] sm:$0xff]
    %v1879 = vld [vmem:[#allocation13 + $0x90] sm:$0xff]
    %v1880 = vld [vmem:[#allocation13 + $0x98] sm:$0xff]
    %v1881 = vld [vmem:[#allocation13 + $0xa0] sm:$0xff]
    %v1882 = vld [vmem:[#allocation13 + $0xa8] sm:$0xff]
    %v1883 = vld [vmem:[#allocation13 + $0xb0] sm:$0xff]
    %v1884 = vld [vmem:[#allocation13 + $0xb8] sm:$0xff]
    %v1885 = vld [vmem:[#allocation13 + $0xc0] sm:$0xff]
    %v1886 = vld [vmem:[#allocation13 + $0xc8] sm:$0xff]
    %v1887 = vld [vmem:[#allocation13 + $0xd0] sm:$0xff]
    %v1888 = vld [vmem:[#allocation13 + $0xd8] sm:$0xff]
    %v1889 = vld [vmem:[#allocation13 + $0xe0] sm:$0xff]
    %v1890 = vld [vmem:[#allocation13 + $0xe8] sm:$0xff]
    %v1891 = vld [vmem:[#allocation13 + $0xf0] sm:$0xff]
    %v1892 = vld [vmem:[#allocation13 + $0xf8] sm:$0xff]
    %v1893 = vld [vmem:[%s15] sm:$0x3]
    %v1895 = vlaneseq
    %v1896 = vshrl.u32 %v1895, 7
    %v1897 = vsub.s32 0, %v1896
    %v1898 = vrot.slane %v1893, %v1897
    %v1899 = vlaneseq
    %v1900 = vshrl.u32 %v1899, 7
    %v1901 = vsub.s32 1, %v1900
    %v1902 = vrot.slane %v1893, %v1901
    %v1937 = vunpack.c.l.b16 %v1861
    %v1938 = vunpack.c.h.b16 %v1861
    %v1939 = vunpack.c.l.b16 %v1862
    %v1940 = vunpack.c.h.b16 %v1862
    %v1941 = vunpack.c.l.b16 %v1863
    %v1942 = vunpack.c.h.b16 %v1863
    %v1943 = vunpack.c.l.b16 %v1864
    %v1944 = vunpack.c.h.b16 %v1864
    %v1945 = vunpack.c.l.b16 %v1865
    %v1946 = vunpack.c.h.b16 %v1865
    %v1947 = vunpack.c.l.b16 %v1866
    %v1948 = vunpack.c.h.b16 %v1866
    %v1949 = vunpack.c.l.b16 %v1867
    %v1950 = vunpack.c.h.b16 %v1867
    %v1951 = vunpack.c.l.b16 %v1868
    %v1952 = vunpack.c.h.b16 %v1868
    %v1953 = vunpack.c.l.b16 %v1869
    %v1954 = vunpack.c.h.b16 %v1869
    %v1955 = vunpack.c.l.b16 %v1870
    %v1956 = vunpack.c.h.b16 %v1870
    %v1957 = vunpack.c.l.b16 %v1871
    %v1958 = vunpack.c.h.b16 %v1871
    %v1959 = vunpack.c.l.b16 %v1872
    %v1960 = vunpack.c.h.b16 %v1872
    %v1961 = vunpack.c.l.b16 %v1873
    %v1962 = vunpack.c.h.b16 %v1873
    %v1963 = vunpack.c.l.b16 %v1874
    %v1964 = vunpack.c.h.b16 %v1874
    %v1965 = vunpack.c.l.b16 %v1875
    %v1966 = vunpack.c.h.b16 %v1875
    %v1967 = vunpack.c.l.b16 %v1876
    %v1968 = vunpack.c.h.b16 %v1876
    %v1969 = vunpack.c.l.b16 %v1877
    %v1970 = vunpack.c.h.b16 %v1877
    %v1971 = vunpack.c.l.b16 %v1878
    %v1972 = vunpack.c.h.b16 %v1878
    %v1973 = vunpack.c.l.b16 %v1879
    %v1974 = vunpack.c.h.b16 %v1879
    %v1975 = vunpack.c.l.b16 %v1880
    %v1976 = vunpack.c.h.b16 %v1880
    %v1977 = vunpack.c.l.b16 %v1881
    %v1978 = vunpack.c.h.b16 %v1881
    %v1979 = vunpack.c.l.b16 %v1882
    %v1980 = vunpack.c.h.b16 %v1882
    %v1981 = vunpack.c.l.b16 %v1883
    %v1982 = vunpack.c.h.b16 %v1883
    %v1983 = vunpack.c.l.b16 %v1884
    %v1984 = vunpack.c.h.b16 %v1884
    %v1985 = vunpack.c.l.b16 %v1885
    %v1986 = vunpack.c.h.b16 %v1885
    %v1987 = vunpack.c.l.b16 %v1886
    %v1988 = vunpack.c.h.b16 %v1886
    %v1989 = vunpack.c.l.b16 %v1887
    %v1990 = vunpack.c.h.b16 %v1887
    %v1991 = vunpack.c.l.b16 %v1888
    %v1992 = vunpack.c.h.b16 %v1888
    %v1993 = vunpack.c.l.b16 %v1889
    %v1994 = vunpack.c.h.b16 %v1889
    %v1995 = vunpack.c.l.b16 %v1890
    %v1996 = vunpack.c.h.b16 %v1890
    %v1997 = vunpack.c.l.b16 %v1891
    %v1998 = vunpack.c.h.b16 %v1891
    %v1999 = vunpack.c.l.b16 %v1892
    %v2000 = vunpack.c.h.b16 %v1892
    %v2001 = vpack.c.b16 %v1939, %v1937
    %v2002 = vpack.c.b16 %v1940, %v1938
    %v2003 = vpack.c.b16 %v1943, %v1941
    %v2004 = vpack.c.b16 %v1944, %v1942
    %v2005 = vpack.c.b16 %v1947, %v1945
    %v2006 = vpack.c.b16 %v1948, %v1946
    %v2007 = vpack.c.b16 %v1951, %v1949
    %v2008 = vpack.c.b16 %v1952, %v1950
    %v2009 = vpack.c.b16 %v1955, %v1953
    %v2010 = vpack.c.b16 %v1956, %v1954
    %v2011 = vpack.c.b16 %v1959, %v1957
    %v2012 = vpack.c.b16 %v1960, %v1958
    %v2013 = vpack.c.b16 %v1963, %v1961
    %v2014 = vpack.c.b16 %v1964, %v1962
    %v2015 = vpack.c.b16 %v1967, %v1965
    %v2016 = vpack.c.b16 %v1968, %v1966
    %v2017 = vpack.c.b16 %v1971, %v1969
    %v2018 = vpack.c.b16 %v1972, %v1970
    %v2019 = vpack.c.b16 %v1975, %v1973
    %v2020 = vpack.c.b16 %v1976, %v1974
    %v2021 = vpack.c.b16 %v1979, %v1977
    %v2022 = vpack.c.b16 %v1980, %v1978
    %v2023 = vpack.c.b16 %v1983, %v1981
    %v2024 = vpack.c.b16 %v1984, %v1982
    %v2025 = vpack.c.b16 %v1987, %v1985
    %v2026 = vpack.c.b16 %v1988, %v1986
    %v2027 = vpack.c.b16 %v1991, %v1989
    %v2028 = vpack.c.b16 %v1992, %v1990
    %v2029 = vpack.c.b16 %v1995, %v1993
    %v2030 = vpack.c.b16 %v1996, %v1994
    %v2031 = vpack.c.b16 %v1999, %v1997
    %v2032 = vpack.c.b16 %v2000, %v1998
    %2065 = vmatprep.subr.bf16.mxu0 %v2002
    %2066 = vmatpush1.bf16.msra.mxu0 %v2001
    %2067 = vmatprep.subr.bf16.mxu0 %v2004
    %2068 = vmatpush1.bf16.msra.mxu0 %v2003
    %2069 = vmatprep.subr.bf16.mxu0 %v2006
    %2070 = vmatpush1.bf16.msra.mxu0 %v2005
    %2071 = vmatprep.subr.bf16.mxu0 %v2008
    %2072 = vmatpush1.bf16.msra.mxu0 %v2007
    %2073 = vmatprep.subr.bf16.mxu0 %v2010
    %2074 = vmatpush1.bf16.msra.mxu0 %v2009
    %2075 = vmatprep.subr.bf16.mxu0 %v2012
    %2076 = vmatpush1.bf16.msra.mxu0 %v2011
    %2077 = vmatprep.subr.bf16.mxu0 %v2014
    %2078 = vmatpush1.bf16.msra.mxu0 %v2013
    %2079 = vmatprep.subr.bf16.mxu0 %v2016
    %2080 = vmatpush1.bf16.msra.mxu0 %v2015
    %2081 = vmatprep.subr.bf16.mxu0 %v2018
    %2082 = vmatpush1.bf16.msra.mxu0 %v2017
    %2083 = vmatprep.subr.bf16.mxu0 %v2020
    %2084 = vmatpush1.bf16.msra.mxu0 %v2019
    %2085 = vmatprep.subr.bf16.mxu0 %v2022
    %2086 = vmatpush1.bf16.msra.mxu0 %v2021
    %2087 = vmatprep.subr.bf16.mxu0 %v2024
    %2088 = vmatpush1.bf16.msra.mxu0 %v2023
    %2089 = vmatprep.subr.bf16.mxu0 %v2026
    %2090 = vmatpush1.bf16.msra.mxu0 %v2025
    %2091 = vmatprep.subr.bf16.mxu0 %v2028
    %2092 = vmatpush1.bf16.msra.mxu0 %v2027
    %2093 = vmatprep.subr.bf16.mxu0 %v2030
    %2094 = vmatpush1.bf16.msra.mxu0 %v2029
    %2095 = vmatprep.subr.bf16.mxu0 %v2032
    %2096 = vmatpush1.bf16.msra.mxu0 %v2031
    %2097 = vmatprep.mubr.bf16.mxu0 %v1860
    %2098 = vmatmul.mubr.bf16.gmra.mrb[0].mxu0 %v1859
    %v2099 = vpop.f32.mrb[0].mxu0
    %v2100 = vadd.f32 %v1898, %v2099
    %v2101 = vpop.f32.mrb[0].mxu0
    %v2102 = vadd.f32 %v1902, %v2101
    %v2103 = vpop.f32.mrb[0].mxu0
    %v2104 = vpop.f32.mrb[0].mxu0
    %2105 = vdwg.mxu0
    %v2106 = vxor.u32 %v2100, 2147483648
    %v2107 = vxor.u32 %v2102, 2147483648
    %v2108 = vmul.f32 %v2106, 1.442695
    %v2109 = vpow.pop %v2108
    %v2110 = vmul.f32 %v2107, 1.442695
    %v2111 = vpow.pop %v2110
    %v2112 = vadd.f32 %v2109, 1.0
    %v2113 = vadd.f32 %v2111, 1.0
    %v2114 = vrcp.pop %v2112
    %v2115 = vmul.f32 1.0, %v2114
    %v2116 = vrcp.pop %v2113
    %v2117 = vmul.f32 1.0, %v2116
    %v2118 = vmul.f32 %v2100, %v2115
    %v2119 = vmul.f32 %v2102, %v2117
    %v2120 = vadd.f32 %v2118, %v2119
    %2121 = vadd.xlane.f32.xlu0 %v2120
    %v2122 = vpop.xlane.xlu0 %2121
    %v2123 = vmul.f32 %v2122, %v1842
    %v2124 = vmul.f32 %v2118, %v2118
    %v2125 = vmul.f32 %v2119, %v2119
    %v2126 = vadd.f32 %v2124, %v2125
    %2127 = vadd.xlane.f32.xlu0 %v2126
    %v2128 = vpop.xlane.xlu0 %2127
    %v2129 = vmul.f32 %v2128, %v1842
    %v2130 = vmul.f32 %v2123, %v2123
    %v2131 = vsub.f32 %v2129, %v2130
    %v2132 = vmax.f32 %v2131, 0.0
    %v2133 = vsub.f32 %v2118, %v2123
    %v2134 = vsub.f32 %v2119, %v2123
    %v2135 = vadd.f32 %v2132, 1e-05
    %v2136 = vrsqrt.pop %v2135
    %v2137 = vmul.f32 %v2133, %v2136
    %v2138 = vmul.f32 %v2134, %v2136
    %v2139 = vpack.c.bf16 %v2137, %v2137
    %v2140 = vpack.c.bf16 %v2138, %v2138
    %v2141 = vld [vmem:[%s16] sm:$0xf]
    %v2142 = vld [vmem:[%s16 + $0x4] sm:$0xf]
    %v2143 = vld [vmem:[%s16 + $0x8] sm:$0xf]
    %v2144 = vld [vmem:[%s16 + $0xc] sm:$0xf]
    %v2145 = vld [vmem:[%s16 + $0x10] sm:$0xf]
    %v2146 = vld [vmem:[%s16 + $0x14] sm:$0xf]
    %v2147 = vld [vmem:[%s16 + $0x18] sm:$0xf]
    %v2148 = vld [vmem:[%s16 + $0x1c] sm:$0xf]
    %v2149 = vld [vmem:[%s16 + $0x20] sm:$0xf]
    %v2150 = vld [vmem:[%s16 + $0x24] sm:$0xf]
    %v2151 = vld [vmem:[%s16 + $0x28] sm:$0xf]
    %v2152 = vld [vmem:[%s16 + $0x2c] sm:$0xf]
    %v2153 = vld [vmem:[%s16 + $0x30] sm:$0xf]
    %v2154 = vld [vmem:[%s16 + $0x34] sm:$0xf]
    %v2155 = vld [vmem:[%s16 + $0x38] sm:$0xf]
    %v2156 = vld [vmem:[%s16 + $0x3c] sm:$0xf]
    %v2157 = vld [vmem:[%s16 + $0x40] sm:$0xf]
    %v2158 = vld [vmem:[%s16 + $0x44] sm:$0xf]
    %v2159 = vld [vmem:[%s16 + $0x48] sm:$0xf]
    %v2160 = vld [vmem:[%s16 + $0x4c] sm:$0xf]
    %v2161 = vld [vmem:[%s16 + $0x50] sm:$0xf]
    %v2162 = vld [vmem:[%s16 + $0x54] sm:$0xf]
    %v2163 = vld [vmem:[%s16 + $0x58] sm:$0xf]
    %v2164 = vld [vmem:[%s16 + $0x5c] sm:$0xf]
    %v2165 = vld [vmem:[%s16 + $0x60] sm:$0xf]
    %v2166 = vld [vmem:[%s16 + $0x64] sm:$0xf]
    %v2167 = vld [vmem:[%s16 + $0x68] sm:$0xf]
    %v2168 = vld [vmem:[%s16 + $0x6c] sm:$0xf]
    %v2169 = vld [vmem:[%s16 + $0x70] sm:$0xf]
    %v2170 = vld [vmem:[%s16 + $0x74] sm:$0xf]
    %v2171 = vld [vmem:[%s16 + $0x78] sm:$0xf]
    %v2172 = vld [vmem:[%s16 + $0x7c] sm:$0xf]
    %v2173 = vld [vmem:[%s17] sm:$0x1]
    %v2175 = vlaneseq
    %v2176 = vshrl.u32 %v2175, 7
    %v2177 = vsub.s32 0, %v2176
    %v2178 = vrot.slane %v2173, %v2177
    %v2212 = vunpack.c.l.b16 %v2141
    %v2213 = vunpack.c.l.b16 %v2142
    %v2214 = vunpack.c.l.b16 %v2143
    %v2215 = vunpack.c.l.b16 %v2144
    %v2216 = vunpack.c.l.b16 %v2145
    %v2217 = vunpack.c.l.b16 %v2146
    %v2218 = vunpack.c.l.b16 %v2147
    %v2219 = vunpack.c.l.b16 %v2148
    %v2220 = vunpack.c.l.b16 %v2149
    %v2221 = vunpack.c.l.b16 %v2150
    %v2222 = vunpack.c.l.b16 %v2151
    %v2223 = vunpack.c.l.b16 %v2152
    %v2224 = vunpack.c.l.b16 %v2153
    %v2225 = vunpack.c.l.b16 %v2154
    %v2226 = vunpack.c.l.b16 %v2155
    %v2227 = vunpack.c.l.b16 %v2156
    %v2228 = vunpack.c.l.b16 %v2157
    %v2229 = vunpack.c.l.b16 %v2158
    %v2230 = vunpack.c.l.b16 %v2159
    %v2231 = vunpack.c.l.b16 %v2160
    %v2232 = vunpack.c.l.b16 %v2161
    %v2233 = vunpack.c.l.b16 %v2162
    %v2234 = vunpack.c.l.b16 %v2163
    %v2235 = vunpack.c.l.b16 %v2164
    %v2236 = vunpack.c.l.b16 %v2165
    %v2237 = vunpack.c.l.b16 %v2166
    %v2238 = vunpack.c.l.b16 %v2167
    %v2239 = vunpack.c.l.b16 %v2168
    %v2240 = vunpack.c.l.b16 %v2169
    %v2241 = vunpack.c.l.b16 %v2170
    %v2242 = vunpack.c.l.b16 %v2171
    %v2243 = vunpack.c.l.b16 %v2172
    %v2244 = vpack.c.b16 %v2213, %v2212
    %v2245 = vpack.c.b16 %v2215, %v2214
    %v2246 = vpack.c.b16 %v2217, %v2216
    %v2247 = vpack.c.b16 %v2219, %v2218
    %v2248 = vpack.c.b16 %v2221, %v2220
    %v2249 = vpack.c.b16 %v2223, %v2222
    %v2250 = vpack.c.b16 %v2225, %v2224
    %v2251 = vpack.c.b16 %v2227, %v2226
    %v2252 = vpack.c.b16 %v2229, %v2228
    %v2253 = vpack.c.b16 %v2231, %v2230
    %v2254 = vpack.c.b16 %v2233, %v2232
    %v2255 = vpack.c.b16 %v2235, %v2234
    %v2256 = vpack.c.b16 %v2237, %v2236
    %v2257 = vpack.c.b16 %v2239, %v2238
    %v2258 = vpack.c.b16 %v2241, %v2240
    %v2259 = vpack.c.b16 %v2243, %v2242
    %2276 = vmatprep.subr.bf16.mxu0 0
    %2277 = vmatpush1.bf16.msra.mxu0 %v2244
    %2278 = vmatprep.subr.bf16.mxu0 0
    %2279 = vmatpush1.bf16.msra.mxu0 %v2245
    %2280 = vmatprep.subr.bf16.mxu0 0
    %2281 = vmatpush1.bf16.msra.mxu0 %v2246
    %2282 = vmatprep.subr.bf16.mxu0 0
    %2283 = vmatpush1.bf16.msra.mxu0 %v2247
    %2284 = vmatprep.subr.bf16.mxu0 0
    %2285 = vmatpush1.bf16.msra.mxu0 %v2248
    %2286 = vmatprep.subr.bf16.mxu0 0
    %2287 = vmatpush1.bf16.msra.mxu0 %v2249
    %2288 = vmatprep.subr.bf16.mxu0 0
    %2289 = vmatpush1.bf16.msra.mxu0 %v2250
    %2290 = vmatprep.subr.bf16.mxu0 0
    %2291 = vmatpush1.bf16.msra.mxu0 %v2251
    %2292 = vmatprep.subr.bf16.mxu0 0
    %2293 = vmatpush1.bf16.msra.mxu0 %v2252
    %2294 = vmatprep.subr.bf16.mxu0 0
    %2295 = vmatpush1.bf16.msra.mxu0 %v2253
    %2296 = vmatprep.subr.bf16.mxu0 0
    %2297 = vmatpush1.bf16.msra.mxu0 %v2254
    %2298 = vmatprep.subr.bf16.mxu0 0
    %2299 = vmatpush1.bf16.msra.mxu0 %v2255
    %2300 = vmatprep.subr.bf16.mxu0 0
    %2301 = vmatpush1.bf16.msra.mxu0 %v2256
    %2302 = vmatprep.subr.bf16.mxu0 0
    %2303 = vmatpush1.bf16.msra.mxu0 %v2257
    %2304 = vmatprep.subr.bf16.mxu0 0
    %2305 = vmatpush1.bf16.msra.mxu0 %v2258
    %2306 = vmatprep.subr.bf16.mxu0 0
    %2307 = vmatpush1.bf16.msra.mxu0 %v2259
    %2308 = vmatprep.mubr.bf16.mxu0 %v2140
    %2309 = vmatmul.mubr.bf16.gmra.mrb[0].mxu0 %v2139
    %v2310 = vpop.f32.mrb[0].mxu0
    %v2311 = vadd.f32 %v2178, %v2310
    %v2312 = vpop.f32.mrb[0].mxu0
    %v2313 = vpop.f32.mrb[0].mxu0
    %v2314 = vpop.f32.mrb[0].mxu0
    %2315 = vdwg.mxu0
    %2316 = vst [vmem:[#allocation14] sm:$0xff] %v2311
    // Predicated region
    $region102: #{tpu_custom_call.1} parent=1 // pred_check
      _
    $region103: #{tpu_custom_call.1} parent=1 // pred_check_branch
      %2318 = sbr.rel (0) target = $region105
    $region104: #{tpu_custom_call.1} parent=1 // pred_region
      %s2320 = ssub.s32 128, 128
      %2321 = vsyncadd [#allocation4], %s2320
      %s2323 = sshll.u32 [#allocation14], 4
      %s2324 = int_to_ptr.vmem [resolvable:$true] %s2323
      %2326 = dma.vmem_to_hbm [thread:$0]  %s2324, 128, %s18, [#allocation4]
    $region105: #{tpu_custom_call.1} parent=1 // pred_fallthru
      _
    // Predicated region
    $region106: #{tpu_custom_call.1} parent=1 // pred_check
      _
    $region107: #{tpu_custom_call.1} parent=1 // pred_check_branch
      %2328 = sbr.rel (0) target = $region109
    $region108: #{tpu_custom_call.1} parent=1 // pred_region
      %2329 = dma.done [#allocation4], 128
    $region109: #{tpu_custom_call.1} parent=1 // pred_fallthru
      _
    %2330 = vsyncpa [#allocation3], 1
    %2331 = vsyncpa [#allocation6], 1
    %2332 = vsyncpa [#allocation9], 1
    %2333 = vsyncpa [#allocation12], 1
    %2334 = vsyncpa [#allocation4], 1

</llo_original>
